<compile_context>
chip_gen: v7x
topology: tpu7x:2x2x1
jax: 0.10.0
libtpu: 0.0.40
codegen_flags: <defaults>
</compile_context>

<pallas_src>
from functools import partial

import jax
import jax.numpy as jnp
from jax import lax
from jax.experimental import pallas as pl
from jax.experimental.pallas import tpu as pltpu

LN_EPS = 1e-5


def _layernorm(h, w, b):
    mu = jnp.mean(h, axis=-1, keepdims=True)
    var = jnp.mean((h - mu) ** 2, axis=-1, keepdims=True)
    return (h - mu) * lax.rsqrt(var + LN_EPS) * w + b


def attention_block_kernel(
    x_ref,               # (N, C)  full sequence for the current batch element (f32)
    ln1w_ref, ln1b_ref,  # (1, C)
    wq_ref,              # (C, C)   bf16, 1/sqrt(Dh) already folded in
    wkv_ref,             # (C, 2C)  bf16
    wproj_ref, bproj_ref,
    ln2w_ref, ln2b_ref,
    w1_ref, b1_ref,
    w2_ref, b2_ref,
    o_ref,               # (TQ, C)
    hf_ref,              # scratch (N, C)      bf16 : cached LayerNorm1(x)
    k_ref,               # scratch (N, H, Dh)  bf16 : cached K
    v_ref,               # scratch (N, H, Dh)  bf16 : cached V
    *, num_heads, tq,
):
    H = num_heads
    N, C = x_ref.shape
    Dh = C // H
    qi = pl.program_id(1)

    ln1w = ln1w_ref[0]
    ln1b = ln1b_ref[0]

    # ---- build the LN1 / K / V caches once per batch element (qi == 0) ----
    @pl.when(qi == 0)
    def _():
        hf = _layernorm(x_ref[...], ln1w, ln1b).astype(jnp.bfloat16)          # (N, C)
        hf_ref[...] = hf
        kv = jnp.dot(hf, wkv_ref[...], preferred_element_type=jnp.float32)    # (N, 2C)
        k_ref[...] = kv[:, :C].reshape(N, H, Dh).astype(jnp.bfloat16)
        v_ref[...] = kv[:, C:].reshape(N, H, Dh).astype(jnp.bfloat16)

    # ---- x = x + Attention(LayerNorm(x)) for the current query tile ----
    start = pl.multiple_of(qi * tq, tq)
    xq = x_ref[pl.ds(start, tq), :]                       # (TQ, C) f32 residual input
    hq = hf_ref[pl.ds(start, tq), :]                      # (TQ, C) bf16 cached LN1 rows

    q3 = jnp.dot(hq, wq_ref[...], preferred_element_type=jnp.float32)  # pre-scaled Q
    q3 = q3.reshape(tq, H, Dh).astype(jnp.bfloat16)       # (TQ, H, Dh)

    # scores[h, q, k] = sum_d q3[q,h,d] * K[k,h,d]   (heads = dot_general batch dim)
    scores = lax.dot_general(
        q3, k_ref[...], (((2,), (2,)), ((1,), (1,))),
        preferred_element_type=jnp.float32)               # (H, TQ, N)

    # softmax: max -> exp -> row-sum -> EUP reciprocal  (attn_drop = Dropout(0.0) -> identity)
    m = jnp.max(scores, axis=-1, keepdims=True)
    p = jnp.exp(scores - m)
    denom = jnp.sum(p, axis=-1, keepdims=True)
    p = (p * pl.reciprocal(denom, approx=True)).astype(jnp.bfloat16)

    # ctx[h, q, d] = sum_k p[h,q,k] * V[k,h,d]
    ctx_h = lax.dot_general(
        p, v_ref[...], (((2,), (0,)), ((0,), (1,))),
        preferred_element_type=jnp.float32)               # (H, TQ, Dh)
    # TODO(synk): fuse this relayout into the projection (multi-contracting-dim dot_general
    # against wproj reshaped to (H, Dh, C)) once that lowering is validated on Mosaic.
    ctx = jnp.swapaxes(ctx_h, 0, 1).reshape(tq, C)        # (TQ, C), col = h*Dh + d

    attn_out = jnp.dot(ctx.astype(jnp.bfloat16), wproj_ref[...],
                       preferred_element_type=jnp.float32) + bproj_ref[0]
    # proj_drop = Dropout(0.0) -> identity
    x1 = xq + attn_out                                    # (TQ, C) f32

    # ---- x = x + MLP(LayerNorm(x)) ----
    h2 = _layernorm(x1, ln2w_ref[0], ln2b_ref[0]).astype(jnp.bfloat16)
    hid = jnp.dot(h2, w1_ref[...], preferred_element_type=jnp.float32) + b1_ref[0]
    hid = jax.nn.gelu(hid, approximate=True).astype(jnp.bfloat16)   # tanh GELU -> EUP
    mlp_out = jnp.dot(hid, w2_ref[...], preferred_element_type=jnp.float32) + b2_ref[0]

    o_ref[...] = (x1 + mlp_out).astype(o_ref.dtype)


def prepare_params(params, *, num_heads, compute_dtype=jnp.bfloat16):
    """One-off host-side weight transform: split qkv into Q / KV halves, fold the attention
    scale into the Q columns, and cast matmul weights to the MXU compute dtype (bf16)."""
    C = params["wqkv"].shape[0]
    scale = (C // num_heads) ** (-0.5)
    return {
        "ln1_w": params["ln1_w"].astype(jnp.float32),
        "ln1_b": params["ln1_b"].astype(jnp.float32),
        "wq": (params["wqkv"][:, :C] * scale).astype(compute_dtype),
        "wkv": params["wqkv"][:, C:].astype(compute_dtype),
        "wproj": params["wproj"].astype(compute_dtype),
        "bproj": params["bproj"].astype(jnp.float32),
        "ln2_w": params["ln2_w"].astype(jnp.float32),
        "ln2_b": params["ln2_b"].astype(jnp.float32),
        "w1": params["w1"].astype(compute_dtype),
        "b1": params["b1"].astype(jnp.float32),
        "w2": params["w2"].astype(compute_dtype),
        "b2": params["b2"].astype(jnp.float32),
    }


def _round_up(x, m):
    return -(-x // m) * m


def _vmem_capacity_bytes():
    """Per-TensorCore VMEM capacity (generation aware); conservative fallback if unavailable."""
    get_info = getattr(pltpu, "get_tpu_info", None)
    if get_info is not None:
        try:
            cap = getattr(get_info(), "vmem_capacity_bytes", None)
            if cap:
                return int(cap)
        except Exception:  # hardware query unavailable on this build/backend
            pass
    return 64 << 20  # v7x per-TC VMEM (smallest of the supported generations)


def _pick_tq(N, num_heads, capacity):
    if N <= 512:
        tq = N
    else:
        tq = next((t for t in (512, 384, 256, 128) if N % t == 0), N)
    # Keep the (H, tq, N) f32 score tensor a small fraction of VMEM (matters most on v7x).
    # TODO(synk): for very long N, tile the KV axis with an online (flash-style) softmax
    # instead of materializing the full (H, tq, N) score tensor.
    while tq > 128 and tq % 2 == 0 and 4 * num_heads * tq * N > capacity // 4:
        tq //= 2
    return tq


def _vmem_limit_bytes(N, C, hidden, tq, num_heads, capacity):
    bf16, f32 = 2, 4
    H = num_heads
    Dh = C // H
    # Pipelined blocks (default double-buffered).  Weight / full-x block indices only change
    # with b, so they are DMA'd once per batch element, but the second buffer is still allocated.
    # TODO(synk): single-buffer weight / full-x blocks (pl.Buffered(1)) once validated on the
    # target JAX build to reclaim this VMEM on v7x.
    weights = bf16 * (4 * C * C + 2 * C * hidden)                    # wq+wkv+wproj+fc1+fc2
    small = f32 * (6 * C + hidden)                                   # LN params + biases
    blocks = 2 * (weights + small + f32 * N * C + f32 * tq * C)      # + x block + out block
    # Persistent scratch: cached LN1(x) + K/V (bf16 tiling pads H -> 16, Dh -> 128 lanes).
    scratch = bf16 * (N * C + 2 * N * _round_up(H, 16) * _round_up(Dh, 128))
    # Transient activations: qi==0 KV projection, scores/probs, ctx (+ relayout), MLP hidden.
    transient = (f32 * (N * 2 * C + N * C)
                 + (f32 + bf16) * H * tq * N
                 + f32 * (H * tq * _round_up(Dh, 128) + 2 * tq * C)
                 + (f32 + bf16) * tq * hidden)
    est = blocks + scratch + int(1.5 * transient) + (6 << 20)
    # Leave headroom for compiler-internal scratch/spills: ~112 MiB on 128 MiB parts (v5e/v6e),
    # ~56 MiB on 64 MiB parts (v7x).
    usable = min(capacity - (8 << 20), (capacity * 7) // 8)
    return int(min(usable, max(32 << 20, est)))


def attention_block(x, kparams, *, num_heads, tq=None):
    B, N, C = x.shape
    hidden = kparams["w1"].shape[1]
    Dh = C // num_heads
    capacity = _vmem_capacity_bytes()
    if tq is None:
        tq = _pick_tq(N, num_heads, capacity)
    assert N % tq == 0, f"query tile tq={tq} must divide sequence length N={N}"
    n_q = N // tq

    kernel = partial(attention_block_kernel, num_heads=num_heads, tq=tq)

    def fixed(shape):
        # grid-invariant block (weights / params): DMA'd once, re-used every step
        return pl.BlockSpec(shape, lambda b, qi: (0,) * len(shape))

    grid_spec = pltpu.PrefetchScalarGridSpec(
        num_scalar_prefetch=0,
        grid=(B, n_q),
        in_specs=[
            pl.BlockSpec((None, N, C), lambda b, qi: (b, 0, 0)),   # x: full sequence of batch b
            fixed((1, C)), fixed((1, C)),                          # ln1 w, b
            fixed((C, C)),                                         # wq (scale folded, bf16)
            fixed((C, 2 * C)),                                     # wkv (bf16)
            fixed((C, C)), fixed((1, C)),                          # proj w (bf16), b
            fixed((1, C)), fixed((1, C)),                          # ln2 w, b
            fixed((C, hidden)), fixed((1, hidden)),                # fc1 w (bf16), b
            fixed((hidden, C)), fixed((1, C)),                     # fc2 w (bf16), b
        ],
        out_specs=pl.BlockSpec((None, tq, C), lambda b, qi: (b, qi, 0)),
        scratch_shapes=[
            pltpu.VMEM((N, C), jnp.bfloat16),               # cached LayerNorm1(x)
            pltpu.VMEM((N, num_heads, Dh), jnp.bfloat16),   # cached K
            pltpu.VMEM((N, num_heads, Dh), jnp.bfloat16),   # cached V
        ],
    )
    return pl.pallas_call(
        kernel,
        out_shape=jax.ShapeDtypeStruct((B, N, C), x.dtype),
        grid_spec=grid_spec,
        compiler_params=pltpu.CompilerParams(
            # b shards across TensorCores (megacore); qi must iterate sequentially on one core
            # so the per-b K/V scratch written at qi==0 is reused by all later query tiles.
            dimension_semantics=("parallel", "arbitrary"),
            vmem_limit_bytes=_vmem_limit_bytes(N, C, hidden, tq, num_heads, capacity),
        ),
    )(
        x,
        kparams["ln1_w"], kparams["ln1_b"],
        kparams["wq"], kparams["wkv"],
        kparams["wproj"], kparams["bproj"],
        kparams["ln2_w"], kparams["ln2_b"],
        kparams["w1"], kparams["b1"],
        kparams["w2"], kparams["b2"],
    )


def attention_block_reference(x, params, *, num_heads):
    """Pure-JAX f32 reference mirroring the PyTorch forward exactly."""
    B, N, C = x.shape
    H = num_heads
    Dh = C // H
    scale = Dh ** (-0.5)

    def ln(h, w, b):
        mu = jnp.mean(h, axis=-1, keepdims=True)
        var = jnp.mean((h - mu) ** 2, axis=-1, keepdims=True)
        return (h - mu) / jnp.sqrt(var + LN_EPS) * w[0] + b[0]

    h = ln(x, params["ln1_w"], params["ln1_b"])
    qkv = h @ params["wqkv"]                                    # (B, N, 3C)
    qkv = qkv.reshape(B, N, 3, H, Dh).transpose(2, 0, 3, 1, 4)  # (3, B, H, N, Dh)
    q, k, v = qkv[0], qkv[1], qkv[2]
    attn = jnp.einsum("bhnd,bhmd->bhnm", q, k) * scale
    attn = jax.nn.softmax(attn, axis=-1)
    ctx = jnp.einsum("bhnm,bhmd->bhnd", attn, v)
    ctx = ctx.transpose(0, 2, 1, 3).reshape(B, N, C)
    x1 = x + ctx @ params["wproj"] + params["bproj"][0]

    h2 = ln(x1, params["ln2_w"], params["ln2_b"])
    hid = jax.nn.gelu(h2 @ params["w1"] + params["b1"][0], approximate=False)
    return x1 + hid @ params["w2"] + params["b2"][0]


if __name__ == "__main__":
    num_heads = 4
    C = 32
    mlp_ratio = 4.0
    hidden = int(C * mlp_ratio)

    key = jax.random.PRNGKey(0)
    ks = jax.random.split(key, 9)

    params = {
        "ln1_w": jnp.ones((1, C), jnp.float32),
        "ln1_b": jnp.zeros((1, C), jnp.float32),
        # qkv_bias=False in the module -> no qkv bias
        "wqkv": (0.02 * jax.random.normal(ks[0], (C, 3 * C))).astype(jnp.float32),
        "wproj": (0.02 * jax.random.normal(ks[1], (C, C))).astype(jnp.float32),
        "bproj": (0.02 * jax.random.normal(ks[2], (1, C))).astype(jnp.float32),
        "ln2_w": jnp.ones((1, C), jnp.float32),
        "ln2_b": jnp.zeros((1, C), jnp.float32),
        "w1": (0.02 * jax.random.normal(ks[3], (C, hidden))).astype(jnp.float32),
        "b1": (0.02 * jax.random.normal(ks[4], (1, hidden))).astype(jnp.float32),
        "w2": (0.02 * jax.random.normal(ks[5], (hidden, C))).astype(jnp.float32),
        "b2": (0.02 * jax.random.normal(ks[6], (1, C))).astype(jnp.float32),
    }
    kparams = prepare_params(params, num_heads=num_heads)     # one-off weight transform

    tol = dict(atol=2e-2, rtol=2e-2)  # bf16 MXU operands, EUP reciprocal, tanh GELU

    # Test 1: single query tile (B=2, N=8, C=32)
    x1 = jax.random.normal(ks[7], (2, 8, C), dtype=jnp.float32)
    out1 = jax.block_until_ready(attention_block(x1, kparams, num_heads=num_heads))
    ref1 = attention_block_reference(x1, params, num_heads=num_heads)
    assert out1.shape == x1.shape
    assert jnp.allclose(out1, ref1, **tol), f"max abs diff = {jnp.max(jnp.abs(out1 - ref1))}"

    # Test 2: multiple query tiles (B=2, N=32, tq=16) -> exercises the persistent K/V cache
    # written at qi==0 and reused by the later query tiles.
    x2 = jax.random.normal(ks[8], (2, 32, C), dtype=jnp.float32)
    out2 = jax.block_until_ready(attention_block(x2, kparams, num_heads=num_heads, tq=16))
    ref2 = attention_block_reference(x2, params, num_heads=num_heads)
    assert out2.shape == x2.shape
    assert jnp.allclose(out2, ref2, **tol), f"max abs diff = {jnp.max(jnp.abs(out2 - ref2))}"

    print("KERNEL_OK")
</pallas_src>

<mosaic_0001>
module attributes {stable_mosaic.version = 11 : i64} {
  func.func @attention_block_kernel(%arg0: i32, %arg1: i32, %arg2: memref<1x8x32xf32, #tpu.memory_space<vmem>>, %arg3: memref<1x32xf32, #tpu.memory_space<vmem>>, %arg4: memref<1x32xf32, #tpu.memory_space<vmem>>, %arg5: memref<32x32xbf16, #tpu.memory_space<vmem>>, %arg6: memref<32x64xbf16, #tpu.memory_space<vmem>>, %arg7: memref<32x32xbf16, #tpu.memory_space<vmem>>, %arg8: memref<1x32xf32, #tpu.memory_space<vmem>>, %arg9: memref<1x32xf32, #tpu.memory_space<vmem>>, %arg10: memref<1x32xf32, #tpu.memory_space<vmem>>, %arg11: memref<32x128xbf16, #tpu.memory_space<vmem>>, %arg12: memref<1x128xf32, #tpu.memory_space<vmem>>, %arg13: memref<128x32xbf16, #tpu.memory_space<vmem>>, %arg14: memref<1x32xf32, #tpu.memory_space<vmem>>, %arg15: memref<1x8x32xf32, #tpu.memory_space<vmem>>, %arg16: memref<8x32xbf16, #tpu.memory_space<vmem>>, %arg17: memref<8x4x8xbf16, #tpu.memory_space<vmem>>, %arg18: memref<8x4x8xbf16, #tpu.memory_space<vmem>>) attributes {dimension_semantics = [#tpu.dimension_semantics<parallel>, #tpu.dimension_semantics<arbitrary>], iteration_bounds = array<i64: 2, 1>, scalar_prefetch = 0 : i64, scratch_operands = 3 : i64, tpu.core_type = #tpu.core_type<tc>, window_params = [{transform_indices = @transform_0, window_bounds = array<i64: 1, 8, 32>}, {pipeline_mode = #tpu.pipeline_mode<synchronous>, transform_indices = @transform_1, window_bounds = array<i64: 1, 32>}, {pipeline_mode = #tpu.pipeline_mode<synchronous>, transform_indices = @transform_2, window_bounds = array<i64: 1, 32>}, {pipeline_mode = #tpu.pipeline_mode<synchronous>, transform_indices = @transform_3, window_bounds = array<i64: 32, 32>}, {pipeline_mode = #tpu.pipeline_mode<synchronous>, transform_indices = @transform_4, window_bounds = array<i64: 32, 64>}, {pipeline_mode = #tpu.pipeline_mode<synchronous>, transform_indices = @transform_5, window_bounds = array<i64: 32, 32>}, {pipeline_mode = #tpu.pipeline_mode<synchronous>, transform_indices = @transform_6, window_bounds = array<i64: 1, 32>}, {pipeline_mode = #tpu.pipeline_mode<synchronous>, transform_indices = @transform_7, window_bounds = array<i64: 1, 32>}, {pipeline_mode = #tpu.pipeline_mode<synchronous>, transform_indices = @transform_8, window_bounds = array<i64: 1, 32>}, {pipeline_mode = #tpu.pipeline_mode<synchronous>, transform_indices = @transform_9, window_bounds = array<i64: 32, 128>}, {pipeline_mode = #tpu.pipeline_mode<synchronous>, transform_indices = @transform_10, window_bounds = array<i64: 1, 128>}, {pipeline_mode = #tpu.pipeline_mode<synchronous>, transform_indices = @transform_11, window_bounds = array<i64: 128, 32>}, {pipeline_mode = #tpu.pipeline_mode<synchronous>, transform_indices = @transform_12, window_bounds = array<i64: 1, 32>}, {transform_indices = @transform_13, window_bounds = array<i64: 1, 8, 32>}]} {
    %c0 = arith.constant 0 : index
    %c0_0 = arith.constant 0 : index
    %0 = vector.load %arg3[%c0, %c0_0] : memref<1x32xf32, #tpu.memory_space<vmem>>, vector<1x32xf32>
    %1 = vector.shape_cast %0 : vector<1x32xf32> to vector<32xf32>
    %c0_1 = arith.constant 0 : index
    %c0_2 = arith.constant 0 : index
    %2 = vector.load %arg4[%c0_1, %c0_2] : memref<1x32xf32, #tpu.memory_space<vmem>>, vector<1x32xf32>
    %3 = vector.shape_cast %2 : vector<1x32xf32> to vector<32xf32>
    %c0_i32 = arith.constant 0 : i32
    %4 = arith.cmpi eq, %arg1, %c0_i32 : i32
    %5 = arith.extui %4 : i1 to i32
    %c0_i32_3 = arith.constant 0 : i32
    %6 = arith.cmpi ne, %5, %c0_i32_3 : i32
    scf.if %6 {
      %c0_50 = arith.constant 0 : index
      %c0_51 = arith.constant 0 : index
      %c0_52 = arith.constant 0 : index
      %105 = vector.load %arg2[%c0_50, %c0_51, %c0_52] : memref<1x8x32xf32, #tpu.memory_space<vmem>>, vector<1x8x32xf32>
      %106 = vector.shape_cast %105 : vector<1x8x32xf32> to vector<8x32xf32>
      %cst_53 = arith.constant dense<0.000000e+00> : vector<8xf32>
      %107 = vector.multi_reduction <add>, %106, %cst_53 [1] : vector<8x32xf32> to vector<8xf32>
      %108 = vector.shape_cast %107 : vector<8xf32> to vector<8x1xf32>
      %cst_54 = arith.constant 3.200000e+01 : f32
      %109 = vector.broadcast %cst_54 : f32 to vector<8x1xf32>
      %110 = arith.divf %108, %109 : vector<8x1xf32>
      %111 = vector.broadcast %110 : vector<8x1xf32> to vector<8x32xf32>
      %112 = arith.subf %106, %111 : vector<8x32xf32>
      %113 = arith.mulf %112, %112 : vector<8x32xf32>
      %cst_55 = arith.constant dense<0.000000e+00> : vector<8xf32>
      %114 = vector.multi_reduction <add>, %113, %cst_55 [1] : vector<8x32xf32> to vector<8xf32>
      %115 = vector.shape_cast %114 : vector<8xf32> to vector<8x1xf32>
      %cst_56 = arith.constant 3.200000e+01 : f32
      %116 = vector.broadcast %cst_56 : f32 to vector<8x1xf32>
      %117 = arith.divf %115, %116 : vector<8x1xf32>
      %118 = vector.broadcast %110 : vector<8x1xf32> to vector<8x32xf32>
      %119 = arith.subf %106, %118 : vector<8x32xf32>
      %cst_57 = arith.constant 9.99999974E-6 : f32
      %120 = vector.broadcast %cst_57 : f32 to vector<8x1xf32>
      %121 = arith.addf %117, %120 : vector<8x1xf32>
      %122 = math.rsqrt %121 : vector<8x1xf32>
      %123 = vector.broadcast %122 : vector<8x1xf32> to vector<8x32xf32>
      %124 = arith.mulf %119, %123 : vector<8x32xf32>
      %125 = vector.shape_cast %1 : vector<32xf32> to vector<1x32xf32>
      %126 = vector.broadcast %125 : vector<1x32xf32> to vector<8x32xf32>
      %127 = arith.mulf %124, %126 : vector<8x32xf32>
      %128 = vector.shape_cast %3 : vector<32xf32> to vector<1x32xf32>
      %129 = vector.broadcast %128 : vector<1x32xf32> to vector<8x32xf32>
      %130 = arith.addf %127, %129 : vector<8x32xf32>
      %131 = arith.truncf %130 : vector<8x32xf32> to vector<8x32xbf16>
      %c0_58 = arith.constant 0 : index
      %c0_59 = arith.constant 0 : index
      %132 = vector.load %arg16[%c0_58, %c0_59] : memref<8x32xbf16, #tpu.memory_space<vmem>>, vector<8x32xbf16>
      tpu.vector_store %arg16[%c0_58, %c0_59], %131 {strides = array<i32>} : memref<8x32xbf16, #tpu.memory_space<vmem>>, vector<8x32xbf16>,
      %c0_60 = arith.constant 0 : index
      %c0_61 = arith.constant 0 : index
      %133 = vector.load %arg6[%c0_60, %c0_61] : memref<32x64xbf16, #tpu.memory_space<vmem>>, vector<32x64xbf16>
      %cst_62 = arith.constant dense<0.000000e+00> : vector<8x64xf32>
      %134 = tpu.matmul %131, %133, %cst_62 {dimension_numbers = #tpu.dot_dimension_numbers<[1], [0], [0], [1], [0, 0, 1, 1], [], []>} : vector<8x32xbf16>, vector<32x64xbf16>, vector<8x64xf32> -> vector<8x64xf32>
      %135 = vector.extract_strided_slice %134 {offsets = [0, 0], sizes = [8, 32], strides = [1, 1]} : vector<8x64xf32> to vector<8x32xf32>
      %136 = vector.shape_cast %135 : vector<8x32xf32> to vector<8x4x8xf32>
      %137 = arith.truncf %136 : vector<8x4x8xf32> to vector<8x4x8xbf16>
      %c0_63 = arith.constant 0 : index
      %c0_64 = arith.constant 0 : index
      %c0_65 = arith.constant 0 : index
      %138 = vector.load %arg17[%c0_63, %c0_64, %c0_65] : memref<8x4x8xbf16, #tpu.memory_space<vmem>>, vector<8x4x8xbf16>
      tpu.vector_store %arg17[%c0_63, %c0_64, %c0_65], %137 {strides = array<i32>} : memref<8x4x8xbf16, #tpu.memory_space<vmem>>, vector<8x4x8xbf16>,
      %139 = vector.extract_strided_slice %134 {offsets = [0, 32], sizes = [8, 32], strides = [1, 1]} : vector<8x64xf32> to vector<8x32xf32>
      %140 = vector.shape_cast %139 : vector<8x32xf32> to vector<8x4x8xf32>
      %141 = arith.truncf %140 : vector<8x4x8xf32> to vector<8x4x8xbf16>
      %c0_66 = arith.constant 0 : index
      %c0_67 = arith.constant 0 : index
      %c0_68 = arith.constant 0 : index
      %142 = vector.load %arg18[%c0_66, %c0_67, %c0_68] : memref<8x4x8xbf16, #tpu.memory_space<vmem>>, vector<8x4x8xbf16>
      tpu.vector_store %arg18[%c0_66, %c0_67, %c0_68], %141 {strides = array<i32>} : memref<8x4x8xbf16, #tpu.memory_space<vmem>>, vector<8x4x8xbf16>,
    } else {
    }
    %c8_i32 = arith.constant 8 : i32
    %7 = arith.muli %arg1, %c8_i32 : i32
    %8 = tpu.assume_multiple %7, 8 : i32
    %c0_4 = arith.constant 0 : index
    %9 = arith.index_cast %8 : i32 to index
    %c0_5 = arith.constant 0 : index
    %10 = vector.load %arg2[%c0_4, %9, %c0_5] : memref<1x8x32xf32, #tpu.memory_space<vmem>>, vector<1x8x32xf32>
    %11 = vector.shape_cast %10 : vector<1x8x32xf32> to vector<8x32xf32>
    %12 = arith.index_cast %8 : i32 to index
    %c0_6 = arith.constant 0 : index
    %13 = vector.load %arg16[%12, %c0_6] : memref<8x32xbf16, #tpu.memory_space<vmem>>, vector<8x32xbf16>
    %c0_7 = arith.constant 0 : index
    %c0_8 = arith.constant 0 : index
    %14 = vector.load %arg5[%c0_7, %c0_8] : memref<32x32xbf16, #tpu.memory_space<vmem>>, vector<32x32xbf16>
    %cst = arith.constant dense<0.000000e+00> : vector<8x32xf32>
    %15 = tpu.matmul %13, %14, %cst {dimension_numbers = #tpu.dot_dimension_numbers<[1], [0], [0], [1], [0, 0, 1, 1], [], []>} : vector<8x32xbf16>, vector<32x32xbf16>, vector<8x32xf32> -> vector<8x32xf32>
    %16 = vector.shape_cast %15 : vector<8x32xf32> to vector<8x4x8xf32>
    %17 = arith.truncf %16 : vector<8x4x8xf32> to vector<8x4x8xbf16>
    %c0_9 = arith.constant 0 : index
    %c0_10 = arith.constant 0 : index
    %c0_11 = arith.constant 0 : index
    %18 = vector.load %arg17[%c0_9, %c0_10, %c0_11] : memref<8x4x8xbf16, #tpu.memory_space<vmem>>, vector<8x4x8xbf16>
    %cst_12 = arith.constant dense<0.000000e+00> : vector<4x8x8xf32>
    %19 = tpu.matmul %17, %18, %cst_12 {dimension_numbers = #tpu.dot_dimension_numbers<[2], [2], [0], [0], [0, 1, 0, 0, 1, 0], [1], [1]>} : vector<8x4x8xbf16>, vector<8x4x8xbf16>, vector<4x8x8xf32> -> vector<4x8x8xf32>
    %cst_13 = arith.constant dense<0xFF800000> : vector<4x8xf32>
    %20 = vector.multi_reduction <maximumf>, %19, %cst_13 [2] : vector<4x8x8xf32> to vector<4x8xf32>
    %21 = vector.shape_cast %20 : vector<4x8xf32> to vector<4x8x1xf32>
    %22 = vector.broadcast %21 : vector<4x8x1xf32> to vector<4x8x8xf32>
    %23 = arith.subf %19, %22 : vector<4x8x8xf32>
    %24 = math.exp %23 : vector<4x8x8xf32>
    %cst_14 = arith.constant dense<0.000000e+00> : vector<4x8xf32>
    %25 = vector.multi_reduction <add>, %24, %cst_14 [2] : vector<4x8x8xf32> to vector<4x8xf32>
    %26 = vector.shape_cast %25 : vector<4x8xf32> to vector<4x8x1xf32>
    %27 = tpu.reciprocal %26 {approx = true} : vector<4x8x1xf32> -> vector<4x8x1xf32>
    %28 = vector.broadcast %27 : vector<4x8x1xf32> to vector<4x8x8xf32>
    %29 = arith.mulf %24, %28 : vector<4x8x8xf32>
    %30 = arith.truncf %29 : vector<4x8x8xf32> to vector<4x8x8xbf16>
    %c0_15 = arith.constant 0 : index
    %c0_16 = arith.constant 0 : index
    %c0_17 = arith.constant 0 : index
    %31 = vector.load %arg18[%c0_15, %c0_16, %c0_17] : memref<8x4x8xbf16, #tpu.memory_space<vmem>>, vector<8x4x8xbf16>
    %cst_18 = arith.constant dense<0.000000e+00> : vector<4x8x8xf32>
    %32 = tpu.matmul %30, %31, %cst_18 {dimension_numbers = #tpu.dot_dimension_numbers<[2], [0], [1], [2], [0, 0, 0, 1, 1, 2], [0], [1]>} : vector<4x8x8xbf16>, vector<8x4x8xbf16>, vector<4x8x8xf32> -> vector<4x8x8xf32>
    %33 = tpu.transpose %32, [1, 0, 2] : vector<4x8x8xf32> -> vector<8x4x8xf32>
    %34 = vector.shape_cast %33 : vector<8x4x8xf32> to vector<8x32xf32>
    %35 = arith.truncf %34 : vector<8x32xf32> to vector<8x32xbf16>
    %c0_19 = arith.constant 0 : index
    %c0_20 = arith.constant 0 : index
    %36 = vector.load %arg7[%c0_19, %c0_20] : memref<32x32xbf16, #tpu.memory_space<vmem>>, vector<32x32xbf16>
    %cst_21 = arith.constant dense<0.000000e+00> : vector<8x32xf32>
    %37 = tpu.matmul %35, %36, %cst_21 {dimension_numbers = #tpu.dot_dimension_numbers<[1], [0], [0], [1], [0, 0, 1, 1], [], []>} : vector<8x32xbf16>, vector<32x32xbf16>, vector<8x32xf32> -> vector<8x32xf32>
    %c0_22 = arith.constant 0 : index
    %c0_23 = arith.constant 0 : index
    %38 = vector.load %arg8[%c0_22, %c0_23] : memref<1x32xf32, #tpu.memory_space<vmem>>, vector<1x32xf32>
    %39 = vector.shape_cast %38 : vector<1x32xf32> to vector<32xf32>
    %40 = vector.shape_cast %39 : vector<32xf32> to vector<1x32xf32>
    %41 = vector.broadcast %40 : vector<1x32xf32> to vector<8x32xf32>
    %42 = arith.addf %37, %41 : vector<8x32xf32>
    %43 = arith.addf %11, %42 : vector<8x32xf32>
    %c0_24 = arith.constant 0 : index
    %c0_25 = arith.constant 0 : index
    %44 = vector.load %arg9[%c0_24, %c0_25] : memref<1x32xf32, #tpu.memory_space<vmem>>, vector<1x32xf32>
    %45 = vector.shape_cast %44 : vector<1x32xf32> to vector<32xf32>
    %c0_26 = arith.constant 0 : index
    %c0_27 = arith.constant 0 : index
    %46 = vector.load %arg10[%c0_26, %c0_27] : memref<1x32xf32, #tpu.memory_space<vmem>>, vector<1x32xf32>
    %47 = vector.shape_cast %46 : vector<1x32xf32> to vector<32xf32>
    %cst_28 = arith.constant dense<0.000000e+00> : vector<8xf32>
    %48 = vector.multi_reduction <add>, %43, %cst_28 [1] : vector<8x32xf32> to vector<8xf32>
    %49 = vector.shape_cast %48 : vector<8xf32> to vector<8x1xf32>
    %cst_29 = arith.constant 3.200000e+01 : f32
    %50 = vector.broadcast %cst_29 : f32 to vector<8x1xf32>
    %51 = arith.divf %49, %50 : vector<8x1xf32>
    %52 = vector.broadcast %51 : vector<8x1xf32> to vector<8x32xf32>
    %53 = arith.subf %43, %52 : vector<8x32xf32>
    %54 = arith.mulf %53, %53 : vector<8x32xf32>
    %cst_30 = arith.constant dense<0.000000e+00> : vector<8xf32>
    %55 = vector.multi_reduction <add>, %54, %cst_30 [1] : vector<8x32xf32> to vector<8xf32>
    %56 = vector.shape_cast %55 : vector<8xf32> to vector<8x1xf32>
    %cst_31 = arith.constant 3.200000e+01 : f32
    %57 = vector.broadcast %cst_31 : f32 to vector<8x1xf32>
    %58 = arith.divf %56, %57 : vector<8x1xf32>
    %59 = vector.broadcast %51 : vector<8x1xf32> to vector<8x32xf32>
    %60 = arith.subf %43, %59 : vector<8x32xf32>
    %cst_32 = arith.constant 9.99999974E-6 : f32
    %61 = vector.broadcast %cst_32 : f32 to vector<8x1xf32>
    %62 = arith.addf %58, %61 : vector<8x1xf32>
    %63 = math.rsqrt %62 : vector<8x1xf32>
    %64 = vector.broadcast %63 : vector<8x1xf32> to vector<8x32xf32>
    %65 = arith.mulf %60, %64 : vector<8x32xf32>
    %66 = vector.shape_cast %45 : vector<32xf32> to vector<1x32xf32>
    %67 = vector.broadcast %66 : vector<1x32xf32> to vector<8x32xf32>
    %68 = arith.mulf %65, %67 : vector<8x32xf32>
    %69 = vector.shape_cast %47 : vector<32xf32> to vector<1x32xf32>
    %70 = vector.broadcast %69 : vector<1x32xf32> to vector<8x32xf32>
    %71 = arith.addf %68, %70 : vector<8x32xf32>
    %72 = arith.truncf %71 : vector<8x32xf32> to vector<8x32xbf16>
    %c0_33 = arith.constant 0 : index
    %c0_34 = arith.constant 0 : index
    %73 = vector.load %arg11[%c0_33, %c0_34] : memref<32x128xbf16, #tpu.memory_space<vmem>>, vector<32x128xbf16>
    %cst_35 = arith.constant dense<0.000000e+00> : vector<8x128xf32>
    %74 = tpu.matmul %72, %73, %cst_35 {dimension_numbers = #tpu.dot_dimension_numbers<[1], [0], [0], [1], [0, 0, 1, 1], [], []>} : vector<8x32xbf16>, vector<32x128xbf16>, vector<8x128xf32> -> vector<8x128xf32>
    %c0_36 = arith.constant 0 : index
    %c0_37 = arith.constant 0 : index
    %75 = vector.load %arg12[%c0_36, %c0_37] : memref<1x128xf32, #tpu.memory_space<vmem>>, vector<1x128xf32>
    %76 = vector.shape_cast %75 : vector<1x128xf32> to vector<128xf32>
    %77 = vector.shape_cast %76 : vector<128xf32> to vector<1x128xf32>
    %78 = vector.broadcast %77 : vector<1x128xf32> to vector<8x128xf32>
    %79 = arith.addf %74, %78 : vector<8x128xf32>
    %80 = arith.mulf %79, %79 : vector<8x128xf32>
    %81 = arith.mulf %79, %80 : vector<8x128xf32>
    %cst_38 = arith.constant 4.471500e-02 : f32
    %82 = vector.broadcast %cst_38 : f32 to vector<8x128xf32>
    %83 = arith.mulf %82, %81 : vector<8x128xf32>
    %84 = arith.addf %79, %83 : vector<8x128xf32>
    %cst_39 = arith.constant 0.797884583 : f32
    %85 = vector.broadcast %cst_39 : f32 to vector<8x128xf32>
    %86 = arith.mulf %85, %84 : vector<8x128xf32>
    %87 = math.tanh %86 : vector<8x128xf32>
    %cst_40 = arith.constant 1.000000e+00 : f32
    %88 = vector.broadcast %cst_40 : f32 to vector<8x128xf32>
    %89 = arith.addf %88, %87 : vector<8x128xf32>
    %cst_41 = arith.constant 5.000000e-01 : f32
    %90 = vector.broadcast %cst_41 : f32 to vector<8x128xf32>
    %91 = arith.mulf %90, %89 : vector<8x128xf32>
    %92 = arith.mulf %79, %91 : vector<8x128xf32>
    %93 = arith.truncf %92 : vector<8x128xf32> to vector<8x128xbf16>
    %c0_42 = arith.constant 0 : index
    %c0_43 = arith.constant 0 : index
    %94 = vector.load %arg13[%c0_42, %c0_43] : memref<128x32xbf16, #tpu.memory_space<vmem>>, vector<128x32xbf16>
    %cst_44 = arith.constant dense<0.000000e+00> : vector<8x32xf32>
    %95 = tpu.matmul %93, %94, %cst_44 {dimension_numbers = #tpu.dot_dimension_numbers<[1], [0], [0], [1], [0, 0, 1, 1], [], []>} : vector<8x128xbf16>, vector<128x32xbf16>, vector<8x32xf32> -> vector<8x32xf32>
    %c0_45 = arith.constant 0 : index
    %c0_46 = arith.constant 0 : index
    %96 = vector.load %arg14[%c0_45, %c0_46] : memref<1x32xf32, #tpu.memory_space<vmem>>, vector<1x32xf32>
    %97 = vector.shape_cast %96 : vector<1x32xf32> to vector<32xf32>
    %98 = vector.shape_cast %97 : vector<32xf32> to vector<1x32xf32>
    %99 = vector.broadcast %98 : vector<1x32xf32> to vector<8x32xf32>
    %100 = arith.addf %95, %99 : vector<8x32xf32>
    %101 = arith.addf %43, %100 : vector<8x32xf32>
    %c0_47 = arith.constant 0 : index
    %c0_48 = arith.constant 0 : index
    %c0_49 = arith.constant 0 : index
    %102 = vector.load %arg15[%c0_47, %c0_48, %c0_49] : memref<1x8x32xf32, #tpu.memory_space<vmem>>, vector<1x8x32xf32>
    %103 = vector.shape_cast %102 : vector<1x8x32xf32> to vector<8x32xf32>
    %104 = vector.shape_cast %101 : vector<8x32xf32> to vector<1x8x32xf32>
    tpu.vector_store %arg15[%c0_47, %c0_48, %c0_49], %104 {strides = array<i32>} : memref<1x8x32xf32, #tpu.memory_space<vmem>>, vector<1x8x32xf32>,
    return
  }
  func.func @transform_0(%arg0: i32, %arg1: i32) -> (i32, i32, i32) {
    %c0_i32 = arith.constant 0 : i32
    %c0_i32_0 = arith.constant 0 : i32
    %c0_i32_1 = arith.constant 0 : i32
    return %arg0, %c0_i32, %c0_i32_0 : i32, i32, i32
  }
  func.func @transform_1(%arg0: i32, %arg1: i32) -> (i32, i32) {
    %c0_i32 = arith.constant 0 : i32
    %c0_i32_0 = arith.constant 0 : i32
    %c0_i32_1 = arith.constant 0 : i32
    return %c0_i32, %c0_i32_0 : i32, i32
  }
  func.func @transform_2(%arg0: i32, %arg1: i32) -> (i32, i32) {
    %c0_i32 = arith.constant 0 : i32
    %c0_i32_0 = arith.constant 0 : i32
    %c0_i32_1 = arith.constant 0 : i32
    return %c0_i32, %c0_i32_0 : i32, i32
  }
  func.func @transform_3(%arg0: i32, %arg1: i32) -> (i32, i32) {
    %c0_i32 = arith.constant 0 : i32
    %c0_i32_0 = arith.constant 0 : i32
    %c0_i32_1 = arith.constant 0 : i32
    return %c0_i32, %c0_i32_0 : i32, i32
  }
  func.func @transform_4(%arg0: i32, %arg1: i32) -> (i32, i32) {
    %c0_i32 = arith.constant 0 : i32
    %c0_i32_0 = arith.constant 0 : i32
    %c0_i32_1 = arith.constant 0 : i32
    return %c0_i32, %c0_i32_0 : i32, i32
  }
  func.func @transform_5(%arg0: i32, %arg1: i32) -> (i32, i32) {
    %c0_i32 = arith.constant 0 : i32
    %c0_i32_0 = arith.constant 0 : i32
    %c0_i32_1 = arith.constant 0 : i32
    return %c0_i32, %c0_i32_0 : i32, i32
  }
  func.func @transform_6(%arg0: i32, %arg1: i32) -> (i32, i32) {
    %c0_i32 = arith.constant 0 : i32
    %c0_i32_0 = arith.constant 0 : i32
    %c0_i32_1 = arith.constant 0 : i32
    return %c0_i32, %c0_i32_0 : i32, i32
  }
  func.func @transform_7(%arg0: i32, %arg1: i32) -> (i32, i32) {
    %c0_i32 = arith.constant 0 : i32
    %c0_i32_0 = arith.constant 0 : i32
    %c0_i32_1 = arith.constant 0 : i32
    return %c0_i32, %c0_i32_0 : i32, i32
  }
  func.func @transform_8(%arg0: i32, %arg1: i32) -> (i32, i32) {
    %c0_i32 = arith.constant 0 : i32
    %c0_i32_0 = arith.constant 0 : i32
    %c0_i32_1 = arith.constant 0 : i32
    return %c0_i32, %c0_i32_0 : i32, i32
  }
  func.func @transform_9(%arg0: i32, %arg1: i32) -> (i32, i32) {
    %c0_i32 = arith.constant 0 : i32
    %c0_i32_0 = arith.constant 0 : i32
    %c0_i32_1 = arith.constant 0 : i32
    return %c0_i32, %c0_i32_0 : i32, i32
  }
  func.func @transform_10(%arg0: i32, %arg1: i32) -> (i32, i32) {
    %c0_i32 = arith.constant 0 : i32
    %c0_i32_0 = arith.constant 0 : i32
    %c0_i32_1 = arith.constant 0 : i32
    return %c0_i32, %c0_i32_0 : i32, i32
  }
  func.func @transform_11(%arg0: i32, %arg1: i32) -> (i32, i32) {
    %c0_i32 = arith.constant 0 : i32
    %c0_i32_0 = arith.constant 0 : i32
    %c0_i32_1 = arith.constant 0 : i32
    return %c0_i32, %c0_i32_0 : i32, i32
  }
  func.func @transform_12(%arg0: i32, %arg1: i32) -> (i32, i32) {
    %c0_i32 = arith.constant 0 : i32
    %c0_i32_0 = arith.constant 0 : i32
    %c0_i32_1 = arith.constant 0 : i32
    return %c0_i32, %c0_i32_0 : i32, i32
  }
  func.func @transform_13(%arg0: i32, %arg1: i32) -> (i32, i32, i32) {
    %c0_i32 = arith.constant 0 : i32
    %c0_i32_0 = arith.constant 0 : i32
    return %arg0, %arg1, %c0_i32 : i32, i32, i32
  }
}

</mosaic_0001>

<llo_original>
// kernel: tpu_custom_call.1
$region0: #{tpu_custom_call.1}
  #allocation0 [shape = 'u32[]', space=smem, size = 0x4, offset = 0x4, fixed_abs, tag = 'smem constant byte address 0x4 - core index']
  #allocation1 [shape = 'u32[144,128]{1,0:T(1,128)}', space=vmem, size = 0x12000, scoped, tag = 'internal scratch']
  #allocation2 [shape = 'bf16[8,32]{1,0:T(8,128)(2,1)}', space=vmem, size = 0x800, scoped, tag = 'scratch operand']
  #allocation3 [shape = 'bf16[8,4,8]{2,1,0:T(4,128)(2,1)}', space=vmem, size = 0x2000, scoped, tag = 'scratch operand']
  #allocation4 [shape = 'bf16[8,4,8]{2,1,0:T(4,128)(2,1)}', space=vmem, size = 0x2000, scoped, tag = 'scratch operand']
  %s0 = inlined_call_operand.vmem [shape: f32[2,8,32], index: 0, kind: input, shape index: {}]
  %s1 = inlined_call_operand.vmem [shape: f32[1,32], index: 1, kind: input, shape index: {}]
  %s2 = inlined_call_operand.vmem [shape: f32[1,32], index: 2, kind: input, shape index: {}]
  %s3 = inlined_call_operand.vmem [shape: bf16[32,32], index: 3, kind: input, shape index: {}]
  %s4 = inlined_call_operand.vmem [shape: bf16[32,64], index: 4, kind: input, shape index: {}]
  %s5 = inlined_call_operand.vmem [shape: bf16[32,32], index: 5, kind: input, shape index: {}]
  %s6 = inlined_call_operand.vmem [shape: f32[1,32], index: 6, kind: input, shape index: {}]
  %s7 = inlined_call_operand.vmem [shape: f32[1,32], index: 7, kind: input, shape index: {}]
  %s8 = inlined_call_operand.vmem [shape: f32[1,32], index: 8, kind: input, shape index: {}]
  %s9 = inlined_call_operand.vmem [shape: bf16[32,128], index: 9, kind: input, shape index: {}]
  %s10 = inlined_call_operand.vmem [shape: f32[1,128], index: 10, kind: input, shape index: {}]
  %s11 = inlined_call_operand.vmem [shape: bf16[128,32], index: 11, kind: input, shape index: {}]
  %s12 = inlined_call_operand.vmem [shape: f32[1,32], index: 12, kind: input, shape index: {}]
  %s13 = inlined_call_operand.hbm [shape: f32[2,8,32], index: 13, kind: output, shape index: {}]
  %s14 = sld [smem:[#allocation0]]
  $region89: #{tpu_custom_call.1} parent=0
    _
  %s16 = ssub.s32 1, %s14
  %s17 = scalar_select 0, %s16, %s14
  $region1: #{tpu_custom_call.1} parent=0
    #allocation5 [shape = 'u8[8192]{0}', space=vmem, size = 0x2000, scoped, tag = 'output window, operand 0']
    #allocation6 [shape = 's32[2]{0}', space=sflag, size = 0x8, scoped, tag = 'scoped memory for tpu_custom_call.1']
    %18 = vsyncpa [#allocation6], 0
    %s19 = scalar_lea.sflag [#allocation6], 1
    %20 = vsyncpa %s19, 0
    loop: start=0, step=1, limit=4
    $region2: #{tpu_custom_call.1} parent=1 // loop_pre_header
      _
    $region3: #{tpu_custom_call.1} parent=1 // loop_header
      %s22 = sphi 0, %s26
      %p23 = scmp.ge.s32.totalorder %s22, 4
      %s29 = sphi 0, %s41
      %s30 = sphi 0, %s37
      %s31 = sphi 0, %s29
      %s32 = sphi 0, %s30
      %s33 = sphi 0, %s31
      %s34 = sphi 0, %s32
      %s44 = sphi 0, %s46
      %s47 = sphi 0, %s44
      %s48 = sphi 0, %s47
      %s64 = sphi 0, %s48
      %s68 = sphi 0, %s68
      %s70 = sphi 0, %s68
      %s71 = sphi 0, %s70
      %s85 = sphi 0, %s71
      %s89 = sphi 0, %s89
      %s91 = sphi 0, %s89
      %s92 = sphi 0, %s91
      %s106 = sphi 0, %s92
      %s110 = sphi 0, %s110
      %s112 = sphi 0, %s110
      %s113 = sphi 0, %s112
      %s127 = sphi 0, %s113
      %s131 = sphi 0, %s131
      %s133 = sphi 0, %s131
      %s134 = sphi 0, %s133
      %s148 = sphi 0, %s134
      %s152 = sphi 0, %s152
      %s154 = sphi 0, %s152
      %s155 = sphi 0, %s154
      %s169 = sphi 0, %s155
      %s173 = sphi 0, %s173
      %s175 = sphi 0, %s173
      %s176 = sphi 0, %s175
      %s190 = sphi 0, %s176
      %s194 = sphi 0, %s194
      %s196 = sphi 0, %s194
      %s197 = sphi 0, %s196
      %s211 = sphi 0, %s197
      %s215 = sphi 0, %s215
      %s217 = sphi 0, %s215
      %s218 = sphi 0, %s217
      %s232 = sphi 0, %s218
      %s236 = sphi 0, %s236
      %s238 = sphi 0, %s236
      %s239 = sphi 0, %s238
      %s253 = sphi 0, %s239
      %s257 = sphi 0, %s257
      %s259 = sphi 0, %s257
      %s260 = sphi 0, %s259
      %s274 = sphi 0, %s260
      %s278 = sphi 0, %s278
      %s280 = sphi 0, %s278
      %s281 = sphi 0, %s280
      %s295 = sphi 0, %s281
      %s299 = sphi 0, %s299
      %s301 = sphi 0, %s299
      %s302 = sphi 0, %s301
      %s316 = sphi 0, %s302
      %s324 = sphi 0, %s326
      %s327 = sphi 0, %s324
      %s328 = sphi 0, %s327
      %s344 = sphi 0, %s328
    $region4: #{tpu_custom_call.1} parent=1 // loop_header_branch
      %25 = sbr.rel (%p23) target = $region8
    $region5: #{tpu_custom_call.1} parent=1 // loop_body
      %s27 = ssub.s32 %s22, 1
      %s28 = ssub.s32 %s22, 2
      %s35 = sadd.s32 1, %s30
      %p36 = scmp.ge.s32.totalorder %s35, 1
      %s37 = scalar_select %p36, 0, %s35
      %s38 = sadd.s32 1, %s29
      %s39 = scalar_select %p36, %s38, %s29
      %p40 = scmp.ge.s32.totalorder %s39, 2
      %s41 = scalar_select %p40, 0, %s39
      %s42 = ssub.s32 %s29, %s41
      %p43 = scmp.eq.s32.totalorder %s42, 0
      %s45 = sadd.s32 %s44, 1
      %s46 = scalar_select %p43, %s44, %s45
      %p49 = pneg %p43
      %p50 = scmp.eq.s32.totalorder %s22, 1
      %p51 = por %p49, %p50
      %p52 = scmp.ne.s32.totalorder %s44, %s47
      %p53 = scmp.eq.s32.totalorder %s22, 0
      %p54 = por %p52, %p53
      %p55 = scmp.ne.s32.totalorder %s44, %s47
      %p56 = scmp.eq.s32.totalorder %s27, 1
      %p57 = por %p55, %p56
      %p58 = scmp.ne.s32.totalorder %s47, %s48
      %p59 = scmp.eq.s32.totalorder %s27, 0
      %p60 = por %p58, %p59
      %p61 = scmp.ne.s32.totalorder %s47, %s48
      %p62 = scmp.eq.s32.totalorder %s28, 1
      %p63 = por %p61, %p62
      %p65 = scmp.ne.s32.totalorder %s48, %s64
      %p66 = scmp.eq.s32.totalorder %s28, 0
      %p67 = por %p65, %p66
      %s69 = sadd.s32 %s68, 1
      %p72 = scmp.eq.s32.totalorder %s22, 1
      %p73 = scmp.ne.s32.totalorder %s68, %s70
      %p74 = scmp.eq.s32.totalorder %s22, 0
      %p75 = por %p73, %p74
      %p76 = scmp.ne.s32.totalorder %s68, %s70
      %p77 = scmp.eq.s32.totalorder %s27, 1
      %p78 = por %p76, %p77
      %p79 = scmp.ne.s32.totalorder %s70, %s71
      %p80 = scmp.eq.s32.totalorder %s27, 0
      %p81 = por %p79, %p80
      %p82 = scmp.ne.s32.totalorder %s70, %s71
      %p83 = scmp.eq.s32.totalorder %s28, 1
      %p84 = por %p82, %p83
      %p86 = scmp.ne.s32.totalorder %s71, %s85
      %p87 = scmp.eq.s32.totalorder %s28, 0
      %p88 = por %p86, %p87
      %s90 = sadd.s32 %s89, 1
      %p93 = scmp.eq.s32.totalorder %s22, 1
      %p94 = scmp.ne.s32.totalorder %s89, %s91
      %p95 = scmp.eq.s32.totalorder %s22, 0
      %p96 = por %p94, %p95
      %p97 = scmp.ne.s32.totalorder %s89, %s91
      %p98 = scmp.eq.s32.totalorder %s27, 1
      %p99 = por %p97, %p98
      %p100 = scmp.ne.s32.totalorder %s91, %s92
      %p101 = scmp.eq.s32.totalorder %s27, 0
      %p102 = por %p100, %p101
      %p103 = scmp.ne.s32.totalorder %s91, %s92
      %p104 = scmp.eq.s32.totalorder %s28, 1
      %p105 = por %p103, %p104
      %p107 = scmp.ne.s32.totalorder %s92, %s106
      %p108 = scmp.eq.s32.totalorder %s28, 0
      %p109 = por %p107, %p108
      %s111 = sadd.s32 %s110, 1
      %p114 = scmp.eq.s32.totalorder %s22, 1
      %p115 = scmp.ne.s32.totalorder %s110, %s112
      %p116 = scmp.eq.s32.totalorder %s22, 0
      %p117 = por %p115, %p116
      %p118 = scmp.ne.s32.totalorder %s110, %s112
      %p119 = scmp.eq.s32.totalorder %s27, 1
      %p120 = por %p118, %p119
      %p121 = scmp.ne.s32.totalorder %s112, %s113
      %p122 = scmp.eq.s32.totalorder %s27, 0
      %p123 = por %p121, %p122
      %p124 = scmp.ne.s32.totalorder %s112, %s113
      %p125 = scmp.eq.s32.totalorder %s28, 1
      %p126 = por %p124, %p125
      %p128 = scmp.ne.s32.totalorder %s113, %s127
      %p129 = scmp.eq.s32.totalorder %s28, 0
      %p130 = por %p128, %p129
      %s132 = sadd.s32 %s131, 1
      %p135 = scmp.eq.s32.totalorder %s22, 1
      %p136 = scmp.ne.s32.totalorder %s131, %s133
      %p137 = scmp.eq.s32.totalorder %s22, 0
      %p138 = por %p136, %p137
      %p139 = scmp.ne.s32.totalorder %s131, %s133
      %p140 = scmp.eq.s32.totalorder %s27, 1
      %p141 = por %p139, %p140
      %p142 = scmp.ne.s32.totalorder %s133, %s134
      %p143 = scmp.eq.s32.totalorder %s27, 0
      %p144 = por %p142, %p143
      %p145 = scmp.ne.s32.totalorder %s133, %s134
      %p146 = scmp.eq.s32.totalorder %s28, 1
      %p147 = por %p145, %p146
      %p149 = scmp.ne.s32.totalorder %s134, %s148
      %p150 = scmp.eq.s32.totalorder %s28, 0
      %p151 = por %p149, %p150
      %s153 = sadd.s32 %s152, 1
      %p156 = scmp.eq.s32.totalorder %s22, 1
      %p157 = scmp.ne.s32.totalorder %s152, %s154
      %p158 = scmp.eq.s32.totalorder %s22, 0
      %p159 = por %p157, %p158
      %p160 = scmp.ne.s32.totalorder %s152, %s154
      %p161 = scmp.eq.s32.totalorder %s27, 1
      %p162 = por %p160, %p161
      %p163 = scmp.ne.s32.totalorder %s154, %s155
      %p164 = scmp.eq.s32.totalorder %s27, 0
      %p165 = por %p163, %p164
      %p166 = scmp.ne.s32.totalorder %s154, %s155
      %p167 = scmp.eq.s32.totalorder %s28, 1
      %p168 = por %p166, %p167
      %p170 = scmp.ne.s32.totalorder %s155, %s169
      %p171 = scmp.eq.s32.totalorder %s28, 0
      %p172 = por %p170, %p171
      %s174 = sadd.s32 %s173, 1
      %p177 = scmp.eq.s32.totalorder %s22, 1
      %p178 = scmp.ne.s32.totalorder %s173, %s175
      %p179 = scmp.eq.s32.totalorder %s22, 0
      %p180 = por %p178, %p179
      %p181 = scmp.ne.s32.totalorder %s173, %s175
      %p182 = scmp.eq.s32.totalorder %s27, 1
      %p183 = por %p181, %p182
      %p184 = scmp.ne.s32.totalorder %s175, %s176
      %p185 = scmp.eq.s32.totalorder %s27, 0
      %p186 = por %p184, %p185
      %p187 = scmp.ne.s32.totalorder %s175, %s176
      %p188 = scmp.eq.s32.totalorder %s28, 1
      %p189 = por %p187, %p188
      %p191 = scmp.ne.s32.totalorder %s176, %s190
      %p192 = scmp.eq.s32.totalorder %s28, 0
      %p193 = por %p191, %p192
      %s195 = sadd.s32 %s194, 1
      %p198 = scmp.eq.s32.totalorder %s22, 1
      %p199 = scmp.ne.s32.totalorder %s194, %s196
      %p200 = scmp.eq.s32.totalorder %s22, 0
      %p201 = por %p199, %p200
      %p202 = scmp.ne.s32.totalorder %s194, %s196
      %p203 = scmp.eq.s32.totalorder %s27, 1
      %p204 = por %p202, %p203
      %p205 = scmp.ne.s32.totalorder %s196, %s197
      %p206 = scmp.eq.s32.totalorder %s27, 0
      %p207 = por %p205, %p206
      %p208 = scmp.ne.s32.totalorder %s196, %s197
      %p209 = scmp.eq.s32.totalorder %s28, 1
      %p210 = por %p208, %p209
      %p212 = scmp.ne.s32.totalorder %s197, %s211
      %p213 = scmp.eq.s32.totalorder %s28, 0
      %p214 = por %p212, %p213
      %s216 = sadd.s32 %s215, 1
      %p219 = scmp.eq.s32.totalorder %s22, 1
      %p220 = scmp.ne.s32.totalorder %s215, %s217
      %p221 = scmp.eq.s32.totalorder %s22, 0
      %p222 = por %p220, %p221
      %p223 = scmp.ne.s32.totalorder %s215, %s217
      %p224 = scmp.eq.s32.totalorder %s27, 1
      %p225 = por %p223, %p224
      %p226 = scmp.ne.s32.totalorder %s217, %s218
      %p227 = scmp.eq.s32.totalorder %s27, 0
      %p228 = por %p226, %p227
      %p229 = scmp.ne.s32.totalorder %s217, %s218
      %p230 = scmp.eq.s32.totalorder %s28, 1
      %p231 = por %p229, %p230
      %p233 = scmp.ne.s32.totalorder %s218, %s232
      %p234 = scmp.eq.s32.totalorder %s28, 0
      %p235 = por %p233, %p234
      %s237 = sadd.s32 %s236, 1
      %p240 = scmp.eq.s32.totalorder %s22, 1
      %p241 = scmp.ne.s32.totalorder %s236, %s238
      %p242 = scmp.eq.s32.totalorder %s22, 0
      %p243 = por %p241, %p242
      %p244 = scmp.ne.s32.totalorder %s236, %s238
      %p245 = scmp.eq.s32.totalorder %s27, 1
      %p246 = por %p244, %p245
      %p247 = scmp.ne.s32.totalorder %s238, %s239
      %p248 = scmp.eq.s32.totalorder %s27, 0
      %p249 = por %p247, %p248
      %p250 = scmp.ne.s32.totalorder %s238, %s239
      %p251 = scmp.eq.s32.totalorder %s28, 1
      %p252 = por %p250, %p251
      %p254 = scmp.ne.s32.totalorder %s239, %s253
      %p255 = scmp.eq.s32.totalorder %s28, 0
      %p256 = por %p254, %p255
      %s258 = sadd.s32 %s257, 1
      %p261 = scmp.eq.s32.totalorder %s22, 1
      %p262 = scmp.ne.s32.totalorder %s257, %s259
      %p263 = scmp.eq.s32.totalorder %s22, 0
      %p264 = por %p262, %p263
      %p265 = scmp.ne.s32.totalorder %s257, %s259
      %p266 = scmp.eq.s32.totalorder %s27, 1
      %p267 = por %p265, %p266
      %p268 = scmp.ne.s32.totalorder %s259, %s260
      %p269 = scmp.eq.s32.totalorder %s27, 0
      %p270 = por %p268, %p269
      %p271 = scmp.ne.s32.totalorder %s259, %s260
      %p272 = scmp.eq.s32.totalorder %s28, 1
      %p273 = por %p271, %p272
      %p275 = scmp.ne.s32.totalorder %s260, %s274
      %p276 = scmp.eq.s32.totalorder %s28, 0
      %p277 = por %p275, %p276
      %s279 = sadd.s32 %s278, 1
      %p282 = scmp.eq.s32.totalorder %s22, 1
      %p283 = scmp.ne.s32.totalorder %s278, %s280
      %p284 = scmp.eq.s32.totalorder %s22, 0
      %p285 = por %p283, %p284
      %p286 = scmp.ne.s32.totalorder %s278, %s280
      %p287 = scmp.eq.s32.totalorder %s27, 1
      %p288 = por %p286, %p287
      %p289 = scmp.ne.s32.totalorder %s280, %s281
      %p290 = scmp.eq.s32.totalorder %s27, 0
      %p291 = por %p289, %p290
      %p292 = scmp.ne.s32.totalorder %s280, %s281
      %p293 = scmp.eq.s32.totalorder %s28, 1
      %p294 = por %p292, %p293
      %p296 = scmp.ne.s32.totalorder %s281, %s295
      %p297 = scmp.eq.s32.totalorder %s28, 0
      %p298 = por %p296, %p297
      %s300 = sadd.s32 %s299, 1
      %p303 = scmp.eq.s32.totalorder %s22, 1
      %p304 = scmp.ne.s32.totalorder %s299, %s301
      %p305 = scmp.eq.s32.totalorder %s22, 0
      %p306 = por %p304, %p305
      %p307 = scmp.ne.s32.totalorder %s299, %s301
      %p308 = scmp.eq.s32.totalorder %s27, 1
      %p309 = por %p307, %p308
      %p310 = scmp.ne.s32.totalorder %s301, %s302
      %p311 = scmp.eq.s32.totalorder %s27, 0
      %p312 = por %p310, %p311
      %p313 = scmp.ne.s32.totalorder %s301, %s302
      %p314 = scmp.eq.s32.totalorder %s28, 1
      %p315 = por %p313, %p314
      %p317 = scmp.ne.s32.totalorder %s302, %s316
      %p318 = scmp.eq.s32.totalorder %s28, 0
      %p319 = por %p317, %p318
      %s320 = ssub.s32 %s29, %s41
      %s321 = ssub.s32 %s30, %s37
      %s322 = sor.u32 %s320, %s321
      %p323 = scmp.eq.s32.totalorder %s322, 0
      %s325 = sadd.s32 %s324, 1
      %s326 = scalar_select %p323, %s324, %s325
      %p329 = pneg %p323
      %p330 = scmp.eq.s32.totalorder %s22, 1
      %p331 = por %p329, %p330
      %p332 = scmp.ne.s32.totalorder %s324, %s327
      %p333 = scmp.eq.s32.totalorder %s22, 0
      %p334 = por %p332, %p333
      %p335 = scmp.ne.s32.totalorder %s324, %s327
      %p336 = scmp.eq.s32.totalorder %s27, 1
      %p337 = por %p335, %p336
      %p338 = scmp.ne.s32.totalorder %s327, %s328
      %p339 = scmp.eq.s32.totalorder %s27, 0
      %p340 = por %p338, %p339
      %p341 = scmp.ne.s32.totalorder %s327, %s328
      %p342 = scmp.eq.s32.totalorder %s28, 1
      %p343 = por %p341, %p342
      %p345 = scmp.ne.s32.totalorder %s328, %s344
      %p346 = scmp.eq.s32.totalorder %s28, 0
      %p347 = por %p345, %p346
      %p348 = scmp.le.s32.totalorder 1, %s22
      %p349 = scmp.lt.s32.totalorder %s22, 3
      %p350 = pnand %p348, %p349
      %p351 = pneg %p350
      // Predicated region
      $region9: #{tpu_custom_call.1} parent=5 // pred_check
        _
      $region10: #{tpu_custom_call.1} parent=5 // pred_check_branch
        %353 = sbr.rel (%p350) target = $region12
      $region11: #{tpu_custom_call.1} parent=5 // pred_region
        %s354 = ssub.s32 %s22, 1
        // Predicated region
        $region13: #{tpu_custom_call.1} parent=11 // pred_check
          %p355 = pneg %p81
        $region14: #{tpu_custom_call.1} parent=11 // pred_check_branch
          %357 = sbr.rel (%p355) target = $region16
        $region15: #{tpu_custom_call.1} parent=11 // pred_region
          _
        $region16: #{tpu_custom_call.1} parent=11 // pred_fallthru
          _
        // Predicated region
        $region17: #{tpu_custom_call.1} parent=11 // pred_check
          %p358 = pneg %p102
        $region18: #{tpu_custom_call.1} parent=11 // pred_check_branch
          %360 = sbr.rel (%p358) target = $region20
        $region19: #{tpu_custom_call.1} parent=11 // pred_region
          _
        $region20: #{tpu_custom_call.1} parent=11 // pred_fallthru
          _
        // Predicated region
        $region21: #{tpu_custom_call.1} parent=11 // pred_check
          %p361 = pneg %p123
        $region22: #{tpu_custom_call.1} parent=11 // pred_check_branch
          %363 = sbr.rel (%p361) target = $region24
        $region23: #{tpu_custom_call.1} parent=11 // pred_region
          _
        $region24: #{tpu_custom_call.1} parent=11 // pred_fallthru
          _
        // Predicated region
        $region25: #{tpu_custom_call.1} parent=11 // pred_check
          %p364 = pneg %p144
        $region26: #{tpu_custom_call.1} parent=11 // pred_check_branch
          %366 = sbr.rel (%p364) target = $region28
        $region27: #{tpu_custom_call.1} parent=11 // pred_region
          _
        $region28: #{tpu_custom_call.1} parent=11 // pred_fallthru
          _
        // Predicated region
        $region29: #{tpu_custom_call.1} parent=11 // pred_check
          %p367 = pneg %p165
        $region30: #{tpu_custom_call.1} parent=11 // pred_check_branch
          %369 = sbr.rel (%p367) target = $region32
        $region31: #{tpu_custom_call.1} parent=11 // pred_region
          _
        $region32: #{tpu_custom_call.1} parent=11 // pred_fallthru
          _
        // Predicated region
        $region33: #{tpu_custom_call.1} parent=11 // pred_check
          %p370 = pneg %p186
        $region34: #{tpu_custom_call.1} parent=11 // pred_check_branch
          %372 = sbr.rel (%p370) target = $region36
        $region35: #{tpu_custom_call.1} parent=11 // pred_region
          _
        $region36: #{tpu_custom_call.1} parent=11 // pred_fallthru
          _
        // Predicated region
        $region37: #{tpu_custom_call.1} parent=11 // pred_check
          %p373 = pneg %p207
        $region38: #{tpu_custom_call.1} parent=11 // pred_check_branch
          %375 = sbr.rel (%p373) target = $region40
        $region39: #{tpu_custom_call.1} parent=11 // pred_region
          _
        $region40: #{tpu_custom_call.1} parent=11 // pred_fallthru
          _
        // Predicated region
        $region41: #{tpu_custom_call.1} parent=11 // pred_check
          %p376 = pneg %p228
        $region42: #{tpu_custom_call.1} parent=11 // pred_check_branch
          %378 = sbr.rel (%p376) target = $region44
        $region43: #{tpu_custom_call.1} parent=11 // pred_region
          _
        $region44: #{tpu_custom_call.1} parent=11 // pred_fallthru
          _
        // Predicated region
        $region45: #{tpu_custom_call.1} parent=11 // pred_check
          %p379 = pneg %p249
        $region46: #{tpu_custom_call.1} parent=11 // pred_check_branch
          %381 = sbr.rel (%p379) target = $region48
        $region47: #{tpu_custom_call.1} parent=11 // pred_region
          _
        $region48: #{tpu_custom_call.1} parent=11 // pred_fallthru
          _
        // Predicated region
        $region49: #{tpu_custom_call.1} parent=11 // pred_check
          %p382 = pneg %p270
        $region50: #{tpu_custom_call.1} parent=11 // pred_check_branch
          %384 = sbr.rel (%p382) target = $region52
        $region51: #{tpu_custom_call.1} parent=11 // pred_region
          _
        $region52: #{tpu_custom_call.1} parent=11 // pred_fallthru
          _
        // Predicated region
        $region53: #{tpu_custom_call.1} parent=11 // pred_check
          %p385 = pneg %p291
        $region54: #{tpu_custom_call.1} parent=11 // pred_check_branch
          %387 = sbr.rel (%p385) target = $region56
        $region55: #{tpu_custom_call.1} parent=11 // pred_region
          _
        $region56: #{tpu_custom_call.1} parent=11 // pred_fallthru
          _
        // Predicated region
        $region57: #{tpu_custom_call.1} parent=11 // pred_check
          %p388 = pneg %p312
        $region58: #{tpu_custom_call.1} parent=11 // pred_check_branch
          %390 = sbr.rel (%p388) target = $region60
        $region59: #{tpu_custom_call.1} parent=11 // pred_region
          _
        $region60: #{tpu_custom_call.1} parent=11 // pred_fallthru
          _
      $region12: #{tpu_custom_call.1} parent=5 // pred_fallthru
        _
      %p391 = scmp.lt.s32.totalorder %s22, 2
      // Predicated region
      $region61: #{tpu_custom_call.1} parent=5 // pred_check
        %p392 = pneg %p391
      $region62: #{tpu_custom_call.1} parent=5 // pred_check_branch
        %394 = sbr.rel (%p392) target = $region64
      $region63: #{tpu_custom_call.1} parent=5 // pred_region
        // Predicated region
        $region65: #{tpu_custom_call.1} parent=63 // pred_check
          %p395 = pneg %p54
        $region66: #{tpu_custom_call.1} parent=63 // pred_check_branch
          %397 = sbr.rel (%p395) target = $region68
        $region67: #{tpu_custom_call.1} parent=63 // pred_region
          %p398 = scmp.lt.s32.totalorder %s29, 1
          %s399 = scalar_select %p398, %s29, 1
          %s400 = smul.addr %s399, 8
          %s401 = scalar_lea.vmem %s0, %s400
        $region68: #{tpu_custom_call.1} parent=63 // pred_fallthru
          _
      $region64: #{tpu_custom_call.1} parent=5 // pred_fallthru
        _
      %p402 = scmp.le.s32.totalorder 1, %s22
      %p403 = scmp.lt.s32.totalorder %s22, 3
      %p404 = pnand %p402, %p403
      %p405 = pneg %p404
      // Predicated region
      $region69: #{tpu_custom_call.1} parent=5 // pred_check
        _
      $region70: #{tpu_custom_call.1} parent=5 // pred_check_branch
        %407 = sbr.rel (%p404) target = $region72
      $region71: #{tpu_custom_call.1} parent=5 // pred_region
        %s408 = ssub.s32 %s22, 1
        %p409 = scmp.lt.s32.totalorder %s31, 1
        %s410 = scalar_select %p409, %s31, 1
        %s411 = smul.addr %s410, 8
        %s412 = scalar_lea.vmem %s0, %s411
        %p413 = pneg %p60
        %p414 = pneg %p57
        %p415 = pneg %p81
        %p416 = pneg %p78
        %p417 = pneg %p102
        %p418 = pneg %p99
        %p419 = pneg %p123
        %p420 = pneg %p120
        %p421 = pneg %p144
        %p422 = pneg %p141
        %p423 = pneg %p165
        %p424 = pneg %p162
        %p425 = pneg %p186
        %p426 = pneg %p183
        %p427 = pneg %p207
        %p428 = pneg %p204
        %p429 = pneg %p228
        %p430 = pneg %p225
        %p431 = pneg %p249
        %p432 = pneg %p246
        %p433 = pneg %p270
        %p434 = pneg %p267
        %p435 = pneg %p291
        %p436 = pneg %p288
        %p437 = pneg %p312
        %p438 = pneg %p309
        %p439 = pneg %p340
        %p440 = pneg %p337
        %s441 = sand.u32 %s327, 1
        %s442 = scalar_lea.sflag [#allocation6], %s441
        %s443 = sand.u32 %s327, 1
        %s444 = smul.addr %s443, 8
        %s445 = scalar_lea.vmem [#allocation5], %s444
        %p446 = scmp.lt.s32.totalorder %s31, 1
        %s447 = scalar_select %p446, %s31, 1
        %s448 = smul.addr %s447, 8
        %s449 = scalar_lea.vmem %s0, %s448
        %v451 = vld [vmem:[%s1] sm:$0x1]
        %v452 = vld [vmem:[%s2] sm:$0x1]
        %p453 = scmp.eq.s32.totalorder %s32, 0
        // Predicated region
        $region73: #{tpu_custom_call.1} parent=71 // pred_check
          %p454 = pneg %p453
        $region74: #{tpu_custom_call.1} parent=71 // pred_check_branch
          %456 = sbr.rel (%p454) target = $region76
        $region75: #{tpu_custom_call.1} parent=71 // pred_region
          %v457 = vld [vmem:[%s449] sm:$0xff]
          %vm458 = vcmask 261120
          %v459 = vsel %vm458, %v457, 0.0
          %460 = vadd.xlane.f32.xlu0 %v459
          %v461 = vpop.xlane.xlu0 %460
          %v462 = vrcp.pop 32.0
          %v463 = vmul.f32 %v461, %v462
          %v464 = vsub.f32 %v457, %v463
          %v465 = vmul.f32 %v464, %v464
          %v466 = vsel %vm458, %v465, 0.0
          %467 = vadd.xlane.f32.xlu0 %v466
          %v468 = vpop.xlane.xlu0 %467
          %v469 = vmul.f32 %v468, %v462
          %v470 = vadd.f32 %v469, 1e-05
          %v471 = vrsqrt.pop %v470
          %v472 = vmul.f32 %v464, %v471
          %v474 = vlaneseq
          %v475 = vshrl.u32 %v474, 7
          %v476 = vsub.s32 0, %v475
          %v477 = vrot.slane %v451, %v476
          %v479 = vmul.f32 %v472, %v477
          %v481 = vlaneseq
          %v482 = vshrl.u32 %v481, 7
          %v483 = vsub.s32 0, %v482
          %v484 = vrot.slane %v452, %v483
          %v486 = vadd.f32 %v479, %v484
          %v487 = vpack.c.bf16 %v486, %v486
          %vm488 = vcmask 257024
          %489 = vst.msk [vmem:[#allocation2] sm:$0xf] %vm488, %v487
          %v490 = vld [vmem:[%s4] sm:$0xf]
          %v491 = vld [vmem:[%s4 + $0x4] sm:$0xf]
          %v492 = vld [vmem:[%s4 + $0x8] sm:$0xf]
          %v493 = vld [vmem:[%s4 + $0xc] sm:$0xf]
          %v498 = vunpack.c.l.b16 %v490
          %v499 = vunpack.c.l.b16 %v491
          %v500 = vunpack.c.l.b16 %v492
          %v501 = vunpack.c.l.b16 %v493
          %v502 = vpack.c.b16 %v499, %v498
          %v503 = vpack.c.b16 %v501, %v500
          %v507 = vsel %vm458, %v487, 0
          %509 = vmatprep.subr.bf16.mxu0 0
          %510 = vmatpush1.bf16.msra.mxu0 %v502
          %511 = vmatprep.subr.bf16.mxu0 0
          %512 = vmatpush1.bf16.msra.mxu0 %v503
          %513 = vmatprep.subr.bf16.mxu0 0
          %514 = vmatpush1.bf16.msra.mxu0 0
          %515 = vmatprep.subr.bf16.mxu0 0
          %516 = vmatpush1.bf16.msra.mxu0 0
          %517 = vmatprep.subr.bf16.mxu0 0
          %518 = vmatpush1.bf16.msra.mxu0 0
          %519 = vmatprep.subr.bf16.mxu0 0
          %520 = vmatpush1.bf16.msra.mxu0 0
          %521 = vmatprep.subr.bf16.mxu0 0
          %522 = vmatpush1.bf16.msra.mxu0 0
          %523 = vmatprep.subr.bf16.mxu0 0
          %524 = vmatpush1.bf16.msra.mxu0 0
          %525 = vmatprep.subr.bf16.mxu0 0
          %526 = vmatpush1.bf16.msra.mxu0 0
          %527 = vmatprep.subr.bf16.mxu0 0
          %528 = vmatpush1.bf16.msra.mxu0 0
          %529 = vmatprep.subr.bf16.mxu0 0
          %530 = vmatpush1.bf16.msra.mxu0 0
          %531 = vmatprep.subr.bf16.mxu0 0
          %532 = vmatpush1.bf16.msra.mxu0 0
          %533 = vmatprep.subr.bf16.mxu0 0
          %534 = vmatpush1.bf16.msra.mxu0 0
          %535 = vmatprep.subr.bf16.mxu0 0
          %536 = vmatpush1.bf16.msra.mxu0 0
          %537 = vmatprep.subr.bf16.mxu0 0
          %538 = vmatpush1.bf16.msra.mxu0 0
          %539 = vmatprep.subr.bf16.mxu0 0
          %540 = vmatpush1.bf16.msra.mxu0 0
          %541 = vmatprep.mubr.bf16.mxu0 0
          %542 = vmatmul.mubr.bf16.gmra.mrb[0].mxu0 %v507
          %v543 = vpop.f32.mrb[0].mxu0
          %v544 = vadd.f32 0.0, %v543
          %v545 = vpop.f32.mrb[0].mxu0
          %v546 = vpop.f32.mrb[0].mxu0
          %v547 = vpop.f32.mrb[0].mxu0
          %548 = vdwg.mxu0
          %550 = vrot.lane.b32.xlu0 %v544, 120
          %v551 = vpop.permute.xlu0 %550
          %553 = vrot.lane.b32.xlu0 %v544, 112
          %v554 = vpop.permute.xlu0 %553
          %556 = vrot.lane.b32.xlu0 %v544, 104
          %v557 = vpop.permute.xlu0 %556
          %v559 = vcombine.low %v544, %v554
          %v560 = vcombine.high %v544, %v554
          %v562 = vunpack.c.l.s4 1983009808
          %v563 = vunpack.c.0.s8 %v562
          %v564 = vlaneseq
          %v565 = vshrl.u32 %v564, 7
          %v566 = vsub.s32 %v563, %v565
          %v567 = vrot.slane %v559, %v566
          %v569 = vunpack.c.l.s4 1983009808
          %v570 = vunpack.c.0.s8 %v569
          %v571 = vlaneseq
          %v572 = vshrl.u32 %v571, 7
          %v573 = vsub.s32 %v570, %v572
          %v574 = vrot.slane %v560, %v573
          %v575 = vcombine.low %v551, %v557
          %v576 = vcombine.high %v551, %v557
          %v578 = vunpack.c.l.s4 1983009808
          %v579 = vunpack.c.0.s8 %v578
          %v580 = vlaneseq
          %v581 = vshrl.u32 %v580, 7
          %v582 = vsub.s32 %v579, %v581
          %v583 = vrot.slane %v575, %v582
          %v585 = vunpack.c.l.s4 1983009808
          %v586 = vunpack.c.0.s8 %v585
          %v587 = vlaneseq
          %v588 = vshrl.u32 %v587, 7
          %v589 = vsub.s32 %v586, %v588
          %v590 = vrot.slane %v576, %v589
          %v591 = vcombine.low %v567, %v583
          %v592 = vcombine.high %v567, %v583
          %v594 = vunpack.c.l.s4 1934713408
          %v595 = vunpack.c.0.s8 %v594
          %v596 = vlaneseq
          %v597 = vshrl.u32 %v596, 7
          %v598 = vsub.s32 %v595, %v597
          %v599 = vrot.slane %v591, %v598
          %v601 = vunpack.c.l.s4 1934713408
          %v602 = vunpack.c.0.s8 %v601
          %v603 = vlaneseq
          %v604 = vshrl.u32 %v603, 7
          %v605 = vsub.s32 %v602, %v604
          %v606 = vrot.slane %v592, %v605
          %v607 = vcombine.low %v574, %v590
          %v608 = vcombine.high %v574, %v590
          %v610 = vunpack.c.l.s4 1934713408
          %v611 = vunpack.c.0.s8 %v610
          %v612 = vlaneseq
          %v613 = vshrl.u32 %v612, 7
          %v614 = vsub.s32 %v611, %v613
          %v615 = vrot.slane %v607, %v614
          %v617 = vunpack.c.l.s4 1934713408
          %v618 = vunpack.c.0.s8 %v617
          %v619 = vlaneseq
          %v620 = vshrl.u32 %v619, 7
          %v621 = vsub.s32 %v618, %v620
          %v622 = vrot.slane %v608, %v621
          %v623 = vcombine.high %v599, 0.0
          %v624 = vcombine.high %v606, 0.0
          %v625 = vcombine.high %v615, 0.0
          %v626 = vcombine.high %v622, 0.0
          %v627 = vpack.c.bf16 %v599, %v599
          %v628 = vpack.c.bf16 %v623, %v623
          %v629 = vpack.c.bf16 %v606, %v606
          %v630 = vpack.c.bf16 %v624, %v624
          %v631 = vpack.c.bf16 %v615, %v615
          %v632 = vpack.c.bf16 %v625, %v625
          %v633 = vpack.c.bf16 %v622, %v622
          %v634 = vpack.c.bf16 %v626, %v626
          %vm635 = vcmask 58368
          %636 = vst.msk [vmem:[#allocation3] sm:$0x3] %vm635, %v627
          %637 = vst.msk [vmem:[#allocation3 + $0x2] sm:$0x3] %vm635, %v628
          %638 = vst.msk [vmem:[#allocation3 + $0x4] sm:$0x3] %vm635, %v629
          %639 = vst.msk [vmem:[#allocation3 + $0x6] sm:$0x3] %vm635, %v630
          %640 = vst.msk [vmem:[#allocation3 + $0x8] sm:$0x3] %vm635, %v631
          %641 = vst.msk [vmem:[#allocation3 + $0xa] sm:$0x3] %vm635, %v632
          %642 = vst.msk [vmem:[#allocation3 + $0xc] sm:$0x3] %vm635, %v633
          %643 = vst.msk [vmem:[#allocation3 + $0xe] sm:$0x3] %vm635, %v634
          %644 = vrot.lane.b32.xlu0 %v544, 96
          %v645 = vpop.permute.xlu0 %644
          %646 = vrot.lane.b32.xlu0 %v551, 96
          %v647 = vpop.permute.xlu0 %646
          %648 = vrot.lane.b32.xlu0 %v554, 96
          %v649 = vpop.permute.xlu0 %648
          %650 = vrot.lane.b32.xlu0 %v557, 96
          %v651 = vpop.permute.xlu0 %650
          %v656 = vcombine.low %v645, %v649
          %v657 = vcombine.high %v645, %v649
          %v659 = vunpack.c.l.s4 1983009808
          %v660 = vunpack.c.0.s8 %v659
          %v661 = vlaneseq
          %v662 = vshrl.u32 %v661, 7
          %v663 = vsub.s32 %v660, %v662
          %v664 = vrot.slane %v656, %v663
          %v666 = vunpack.c.l.s4 1983009808
          %v667 = vunpack.c.0.s8 %v666
          %v668 = vlaneseq
          %v669 = vshrl.u32 %v668, 7
          %v670 = vsub.s32 %v667, %v669
          %v671 = vrot.slane %v657, %v670
          %v672 = vcombine.low %v647, %v651
          %v673 = vcombine.high %v647, %v651
          %v675 = vunpack.c.l.s4 1983009808
          %v676 = vunpack.c.0.s8 %v675
          %v677 = vlaneseq
          %v678 = vshrl.u32 %v677, 7
          %v679 = vsub.s32 %v676, %v678
          %v680 = vrot.slane %v672, %v679
          %v682 = vunpack.c.l.s4 1983009808
          %v683 = vunpack.c.0.s8 %v682
          %v684 = vlaneseq
          %v685 = vshrl.u32 %v684, 7
          %v686 = vsub.s32 %v683, %v685
          %v687 = vrot.slane %v673, %v686
          %v688 = vcombine.low %v664, %v680
          %v689 = vcombine.high %v664, %v680
          %v691 = vunpack.c.l.s4 1934713408
          %v692 = vunpack.c.0.s8 %v691
          %v693 = vlaneseq
          %v694 = vshrl.u32 %v693, 7
          %v695 = vsub.s32 %v692, %v694
          %v696 = vrot.slane %v688, %v695
          %v698 = vunpack.c.l.s4 1934713408
          %v699 = vunpack.c.0.s8 %v698
          %v700 = vlaneseq
          %v701 = vshrl.u32 %v700, 7
          %v702 = vsub.s32 %v699, %v701
          %v703 = vrot.slane %v689, %v702
          %v704 = vcombine.low %v671, %v687
          %v705 = vcombine.high %v671, %v687
          %v707 = vunpack.c.l.s4 1934713408
          %v708 = vunpack.c.0.s8 %v707
          %v709 = vlaneseq
          %v710 = vshrl.u32 %v709, 7
          %v711 = vsub.s32 %v708, %v710
          %v712 = vrot.slane %v704, %v711
          %v714 = vunpack.c.l.s4 1934713408
          %v715 = vunpack.c.0.s8 %v714
          %v716 = vlaneseq
          %v717 = vshrl.u32 %v716, 7
          %v718 = vsub.s32 %v715, %v717
          %v719 = vrot.slane %v705, %v718
          %v720 = vcombine.high %v696, 0.0
          %v721 = vcombine.high %v703, 0.0
          %v722 = vcombine.high %v712, 0.0
          %v723 = vcombine.high %v719, 0.0
          %v724 = vpack.c.bf16 %v696, %v696
          %v725 = vpack.c.bf16 %v720, %v720
          %v726 = vpack.c.bf16 %v703, %v703
          %v727 = vpack.c.bf16 %v721, %v721
          %v728 = vpack.c.bf16 %v712, %v712
          %v729 = vpack.c.bf16 %v722, %v722
          %v730 = vpack.c.bf16 %v719, %v719
          %v731 = vpack.c.bf16 %v723, %v723
          %732 = vst.msk [vmem:[#allocation4] sm:$0x3] %vm635, %v724
          %733 = vst.msk [vmem:[#allocation4 + $0x2] sm:$0x3] %vm635, %v725
          %734 = vst.msk [vmem:[#allocation4 + $0x4] sm:$0x3] %vm635, %v726
          %735 = vst.msk [vmem:[#allocation4 + $0x6] sm:$0x3] %vm635, %v727
          %736 = vst.msk [vmem:[#allocation4 + $0x8] sm:$0x3] %vm635, %v728
          %737 = vst.msk [vmem:[#allocation4 + $0xa] sm:$0x3] %vm635, %v729
          %738 = vst.msk [vmem:[#allocation4 + $0xc] sm:$0x3] %vm635, %v730
          %739 = vst.msk [vmem:[#allocation4 + $0xe] sm:$0x3] %vm635, %v731
        $region76: #{tpu_custom_call.1} parent=71 // pred_fallthru
          _
        %s740 = smul.u32 %s32, 8
        %s741 = scalar_lea.vmem %s449, %s740
        %v742 = vld [vmem:[%s741] sm:$0xff]
        %s743 = sshra.s32 %s740, 3
        %s744 = sand.u32 %s740, 7
        %s745 = smul.addr %s743, 4
        %s746 = scalar_lea.vmem [#allocation2], %s745
        %v747 = vld [vmem:[%s746] sm:$0xf]
        %v748 = vld [vmem:[%s3] sm:$0xf]
        %v749 = vld [vmem:[%s3 + $0x4] sm:$0xf]
        %v750 = vld [vmem:[%s3 + $0x8] sm:$0xf]
        %v751 = vld [vmem:[%s3 + $0xc] sm:$0xf]
        %v756 = vunpack.c.l.b16 %v748
        %v757 = vunpack.c.l.b16 %v749
        %v758 = vunpack.c.l.b16 %v750
        %v759 = vunpack.c.l.b16 %v751
        %v760 = vpack.c.b16 %v757, %v756
        %v761 = vpack.c.b16 %v759, %v758
        %vm764 = vcmask 261120
        %v766 = vsel %vm764, %v747, 0
        %768 = vmatprep.subr.bf16.mxu0 0
        %769 = vmatpush1.bf16.msra.mxu0 %v760
        %770 = vmatprep.subr.bf16.mxu0 0
        %771 = vmatpush1.bf16.msra.mxu0 %v761
        %772 = vmatprep.subr.bf16.mxu0 0
        %773 = vmatpush1.bf16.msra.mxu0 0
        %774 = vmatprep.subr.bf16.mxu0 0
        %775 = vmatpush1.bf16.msra.mxu0 0
        %776 = vmatprep.subr.bf16.mxu0 0
        %777 = vmatpush1.bf16.msra.mxu0 0
        %778 = vmatprep.subr.bf16.mxu0 0
        %779 = vmatpush1.bf16.msra.mxu0 0
        %780 = vmatprep.subr.bf16.mxu0 0
        %781 = vmatpush1.bf16.msra.mxu0 0
        %782 = vmatprep.subr.bf16.mxu0 0
        %783 = vmatpush1.bf16.msra.mxu0 0
        %784 = vmatprep.subr.bf16.mxu0 0
        %785 = vmatpush1.bf16.msra.mxu0 0
        %786 = vmatprep.subr.bf16.mxu0 0
        %787 = vmatpush1.bf16.msra.mxu0 0
        %788 = vmatprep.subr.bf16.mxu0 0
        %789 = vmatpush1.bf16.msra.mxu0 0
        %790 = vmatprep.subr.bf16.mxu0 0
        %791 = vmatpush1.bf16.msra.mxu0 0
        %792 = vmatprep.subr.bf16.mxu0 0
        %793 = vmatpush1.bf16.msra.mxu0 0
        %794 = vmatprep.subr.bf16.mxu0 0
        %795 = vmatpush1.bf16.msra.mxu0 0
        %796 = vmatprep.subr.bf16.mxu0 0
        %797 = vmatpush1.bf16.msra.mxu0 0
        %798 = vmatprep.subr.bf16.mxu0 0
        %799 = vmatpush1.bf16.msra.mxu0 0
        %800 = vmatprep.mubr.bf16.mxu0 0
        %801 = vmatmul.mubr.bf16.gmra.mrb[0].mxu0 %v766
        %v802 = vpop.f32.mrb[0].mxu0
        %v803 = vadd.f32 0.0, %v802
        %v804 = vpop.f32.mrb[0].mxu0
        %v805 = vpop.f32.mrb[0].mxu0
        %v806 = vpop.f32.mrb[0].mxu0
        %807 = vdwg.mxu0
        %809 = vrot.lane.b32.xlu0 %v803, 120
        %v810 = vpop.permute.xlu0 %809
        %812 = vrot.lane.b32.xlu0 %v803, 112
        %v813 = vpop.permute.xlu0 %812
        %815 = vrot.lane.b32.xlu0 %v803, 104
        %v816 = vpop.permute.xlu0 %815
        %v818 = vcombine.low %v803, %v813
        %v819 = vcombine.high %v803, %v813
        %v821 = vunpack.c.l.s4 1983009808
        %v822 = vunpack.c.0.s8 %v821
        %v823 = vlaneseq
        %v824 = vshrl.u32 %v823, 7
        %v825 = vsub.s32 %v822, %v824
        %v826 = vrot.slane %v818, %v825
        %v828 = vunpack.c.l.s4 1983009808
        %v829 = vunpack.c.0.s8 %v828
        %v830 = vlaneseq
        %v831 = vshrl.u32 %v830, 7
        %v832 = vsub.s32 %v829, %v831
        %v833 = vrot.slane %v819, %v832
        %v834 = vcombine.low %v810, %v816
        %v835 = vcombine.high %v810, %v816
        %v837 = vunpack.c.l.s4 1983009808
        %v838 = vunpack.c.0.s8 %v837
        %v839 = vlaneseq
        %v840 = vshrl.u32 %v839, 7
        %v841 = vsub.s32 %v838, %v840
        %v842 = vrot.slane %v834, %v841
        %v844 = vunpack.c.l.s4 1983009808
        %v845 = vunpack.c.0.s8 %v844
        %v846 = vlaneseq
        %v847 = vshrl.u32 %v846, 7
        %v848 = vsub.s32 %v845, %v847
        %v849 = vrot.slane %v835, %v848
        %v850 = vcombine.low %v826, %v842
        %v851 = vcombine.high %v826, %v842
        %v853 = vunpack.c.l.s4 1934713408
        %v854 = vunpack.c.0.s8 %v853
        %v855 = vlaneseq
        %v856 = vshrl.u32 %v855, 7
        %v857 = vsub.s32 %v854, %v856
        %v858 = vrot.slane %v850, %v857
        %v860 = vunpack.c.l.s4 1934713408
        %v861 = vunpack.c.0.s8 %v860
        %v862 = vlaneseq
        %v863 = vshrl.u32 %v862, 7
        %v864 = vsub.s32 %v861, %v863
        %v865 = vrot.slane %v851, %v864
        %v866 = vcombine.low %v833, %v849
        %v867 = vcombine.high %v833, %v849
        %v869 = vunpack.c.l.s4 1934713408
        %v870 = vunpack.c.0.s8 %v869
        %v871 = vlaneseq
        %v872 = vshrl.u32 %v871, 7
        %v873 = vsub.s32 %v870, %v872
        %v874 = vrot.slane %v866, %v873
        %v876 = vunpack.c.l.s4 1934713408
        %v877 = vunpack.c.0.s8 %v876
        %v878 = vlaneseq
        %v879 = vshrl.u32 %v878, 7
        %v880 = vsub.s32 %v877, %v879
        %v881 = vrot.slane %v867, %v880
        %v882 = vcombine.high %v858, 0.0
        %v883 = vcombine.high %v865, 0.0
        %v884 = vcombine.high %v874, 0.0
        %v885 = vcombine.high %v881, 0.0
        %v886 = vpack.c.bf16 %v858, %v858
        %v887 = vpack.c.bf16 %v882, %v882
        %v888 = vpack.c.bf16 %v865, %v865
        %v889 = vpack.c.bf16 %v883, %v883
        %v890 = vpack.c.bf16 %v874, %v874
        %v891 = vpack.c.bf16 %v884, %v884
        %v892 = vpack.c.bf16 %v881, %v881
        %v893 = vpack.c.bf16 %v885, %v885
        %v894 = vld [vmem:[#allocation3] sm:$0x3]
        %v895 = vld [vmem:[#allocation3 + $0x2] sm:$0x3]
        %v896 = vld [vmem:[#allocation3 + $0x4] sm:$0x3]
        %v897 = vld [vmem:[#allocation3 + $0x6] sm:$0x3]
        %v898 = vld [vmem:[#allocation3 + $0x8] sm:$0x3]
        %v899 = vld [vmem:[#allocation3 + $0xa] sm:$0x3]
        %v900 = vld [vmem:[#allocation3 + $0xc] sm:$0x3]
        %v901 = vld [vmem:[#allocation3 + $0xe] sm:$0x3]
        %v902 = vcombine.low %v886, %v890
        %v904 = vunpack.c.l.s4 1983009808
        %v905 = vunpack.c.0.s8 %v904
        %v906 = vlaneseq
        %v907 = vshrl.u32 %v906, 7
        %v908 = vsub.s32 %v905, %v907
        %v909 = vrot.slane %v902, %v908
        %v910 = vcombine.low %v888, %v892
        %v912 = vunpack.c.l.s4 1983009808
        %v913 = vunpack.c.0.s8 %v912
        %v914 = vlaneseq
        %v915 = vshrl.u32 %v914, 7
        %v916 = vsub.s32 %v913, %v915
        %v917 = vrot.slane %v910, %v916
        %v918 = vcombine.low %v909, %v917
        %v920 = vunpack.c.l.s4 1934713408
        %v921 = vunpack.c.0.s8 %v920
        %v922 = vlaneseq
        %v923 = vshrl.u32 %v922, 7
        %v924 = vsub.s32 %v921, %v923
        %v925 = vrot.slane %v918, %v924
        %v926 = vcombine.high %v925, 0
        %v927 = vcombine.low %v887, %v891
        %v929 = vunpack.c.l.s4 1983009808
        %v930 = vunpack.c.0.s8 %v929
        %v931 = vlaneseq
        %v932 = vshrl.u32 %v931, 7
        %v933 = vsub.s32 %v930, %v932
        %v934 = vrot.slane %v927, %v933
        %v935 = vcombine.low %v889, %v893
        %v937 = vunpack.c.l.s4 1983009808
        %v938 = vunpack.c.0.s8 %v937
        %v939 = vlaneseq
        %v940 = vshrl.u32 %v939, 7
        %v941 = vsub.s32 %v938, %v940
        %v942 = vrot.slane %v935, %v941
        %v943 = vcombine.low %v934, %v942
        %v945 = vunpack.c.l.s4 1934713408
        %v946 = vunpack.c.0.s8 %v945
        %v947 = vlaneseq
        %v948 = vshrl.u32 %v947, 7
        %v949 = vsub.s32 %v946, %v948
        %v950 = vrot.slane %v943, %v949
        %v951 = vcombine.high %v950, 0
        %v954 = vpack.i.b16 %v950, %v925
        %v955 = vshrl.u32 %v925, 16
        %v956 = vshrl.u32 %v950, 16
        %v957 = vpack.i.b16 %v956, %v955
        %v960 = vpack.i.b16 %v951, %v926
        %v961 = vshrl.u32 %v926, 16
        %v962 = vshrl.u32 %v951, 16
        %v963 = vpack.i.b16 %v962, %v961
        %964 = vxpose.xlu0.c.b16.start [1/8] %v894, 128
        %965 = vxpose.xlu0.c.b16.cont [2/8] 0, 128
        %966 = vxpose.xlu0.c.b16.cont [3/8] 0, 128
        %967 = vxpose.xlu0.c.b16.cont [4/8] 0, 128
        %968 = vxpose.xlu0.c.b16.cont [5/8] 0, 128
        %969 = vxpose.xlu0.c.b16.cont [6/8] 0, 128
        %970 = vxpose.xlu0.c.b16.cont [7/8] 0, 128
        %971 = vxpose.xlu0.c.b16.end [8/8] 0, 128
        %v972 = vpop.trf.xlu0
        %v973 = vpop.trf.xlu0
        %v974 = vpop.trf.xlu0
        %v975 = vpop.trf.xlu0
        %v976 = vpop.trf.xlu0
        %v977 = vpop.trf.xlu0
        %v978 = vpop.trf.xlu0
        %v979 = vpop.trf.xlu0
        %980 = vxpose.xlu0.c.b16.start [1/8] %v895, 128
        %981 = vxpose.xlu0.c.b16.cont [2/8] 0, 128
        %982 = vxpose.xlu0.c.b16.cont [3/8] 0, 128
        %983 = vxpose.xlu0.c.b16.cont [4/8] 0, 128
        %984 = vxpose.xlu0.c.b16.cont [5/8] 0, 128
        %985 = vxpose.xlu0.c.b16.cont [6/8] 0, 128
        %986 = vxpose.xlu0.c.b16.cont [7/8] 0, 128
        %987 = vxpose.xlu0.c.b16.end [8/8] 0, 128
        %v988 = vpop.trf.xlu0
        %v989 = vpop.trf.xlu0
        %v990 = vpop.trf.xlu0
        %v991 = vpop.trf.xlu0
        %v992 = vpop.trf.xlu0
        %v993 = vpop.trf.xlu0
        %v994 = vpop.trf.xlu0
        %v995 = vpop.trf.xlu0
        %996 = vxpose.xlu0.c.b16.start [1/8] %v896, 128
        %997 = vxpose.xlu0.c.b16.cont [2/8] 0, 128
        %998 = vxpose.xlu0.c.b16.cont [3/8] 0, 128
        %999 = vxpose.xlu0.c.b16.cont [4/8] 0, 128
        %1000 = vxpose.xlu0.c.b16.cont [5/8] 0, 128
        %1001 = vxpose.xlu0.c.b16.cont [6/8] 0, 128
        %1002 = vxpose.xlu0.c.b16.cont [7/8] 0, 128
        %1003 = vxpose.xlu0.c.b16.end [8/8] 0, 128
        %v1004 = vpop.trf.xlu0
        %v1005 = vpop.trf.xlu0
        %v1006 = vpop.trf.xlu0
        %v1007 = vpop.trf.xlu0
        %v1008 = vpop.trf.xlu0
        %v1009 = vpop.trf.xlu0
        %v1010 = vpop.trf.xlu0
        %v1011 = vpop.trf.xlu0
        %1012 = vxpose.xlu0.c.b16.start [1/8] %v897, 128
        %1013 = vxpose.xlu0.c.b16.cont [2/8] 0, 128
        %1014 = vxpose.xlu0.c.b16.cont [3/8] 0, 128
        %1015 = vxpose.xlu0.c.b16.cont [4/8] 0, 128
        %1016 = vxpose.xlu0.c.b16.cont [5/8] 0, 128
        %1017 = vxpose.xlu0.c.b16.cont [6/8] 0, 128
        %1018 = vxpose.xlu0.c.b16.cont [7/8] 0, 128
        %1019 = vxpose.xlu0.c.b16.end [8/8] 0, 128
        %v1020 = vpop.trf.xlu0
        %v1021 = vpop.trf.xlu0
        %v1022 = vpop.trf.xlu0
        %v1023 = vpop.trf.xlu0
        %v1024 = vpop.trf.xlu0
        %v1025 = vpop.trf.xlu0
        %v1026 = vpop.trf.xlu0
        %v1027 = vpop.trf.xlu0
        %1028 = vxpose.xlu0.c.b16.start [1/8] %v898, 128
        %1029 = vxpose.xlu0.c.b16.cont [2/8] 0, 128
        %1030 = vxpose.xlu0.c.b16.cont [3/8] 0, 128
        %1031 = vxpose.xlu0.c.b16.cont [4/8] 0, 128
        %1032 = vxpose.xlu0.c.b16.cont [5/8] 0, 128
        %1033 = vxpose.xlu0.c.b16.cont [6/8] 0, 128
        %1034 = vxpose.xlu0.c.b16.cont [7/8] 0, 128
        %1035 = vxpose.xlu0.c.b16.end [8/8] 0, 128
        %v1036 = vpop.trf.xlu0
        %v1037 = vpop.trf.xlu0
        %v1038 = vpop.trf.xlu0
        %v1039 = vpop.trf.xlu0
        %v1040 = vpop.trf.xlu0
        %v1041 = vpop.trf.xlu0
        %v1042 = vpop.trf.xlu0
        %v1043 = vpop.trf.xlu0
        %1044 = vxpose.xlu0.c.b16.start [1/8] %v899, 128
        %1045 = vxpose.xlu0.c.b16.cont [2/8] 0, 128
        %1046 = vxpose.xlu0.c.b16.cont [3/8] 0, 128
        %1047 = vxpose.xlu0.c.b16.cont [4/8] 0, 128
        %1048 = vxpose.xlu0.c.b16.cont [5/8] 0, 128
        %1049 = vxpose.xlu0.c.b16.cont [6/8] 0, 128
        %1050 = vxpose.xlu0.c.b16.cont [7/8] 0, 128
        %1051 = vxpose.xlu0.c.b16.end [8/8] 0, 128
        %v1052 = vpop.trf.xlu0
        %v1053 = vpop.trf.xlu0
        %v1054 = vpop.trf.xlu0
        %v1055 = vpop.trf.xlu0
        %v1056 = vpop.trf.xlu0
        %v1057 = vpop.trf.xlu0
        %v1058 = vpop.trf.xlu0
        %v1059 = vpop.trf.xlu0
        %1060 = vxpose.xlu0.c.b16.start [1/8] %v900, 128
        %1061 = vxpose.xlu0.c.b16.cont [2/8] 0, 128
        %1062 = vxpose.xlu0.c.b16.cont [3/8] 0, 128
        %1063 = vxpose.xlu0.c.b16.cont [4/8] 0, 128
        %1064 = vxpose.xlu0.c.b16.cont [5/8] 0, 128
        %1065 = vxpose.xlu0.c.b16.cont [6/8] 0, 128
        %1066 = vxpose.xlu0.c.b16.cont [7/8] 0, 128
        %1067 = vxpose.xlu0.c.b16.end [8/8] 0, 128
        %v1068 = vpop.trf.xlu0
        %v1069 = vpop.trf.xlu0
        %v1070 = vpop.trf.xlu0
        %v1071 = vpop.trf.xlu0
        %v1072 = vpop.trf.xlu0
        %v1073 = vpop.trf.xlu0
        %v1074 = vpop.trf.xlu0
        %v1075 = vpop.trf.xlu0
        %1076 = vxpose.xlu0.c.b16.start [1/8] %v901, 128
        %1077 = vxpose.xlu0.c.b16.cont [2/8] 0, 128
        %1078 = vxpose.xlu0.c.b16.cont [3/8] 0, 128
        %1079 = vxpose.xlu0.c.b16.cont [4/8] 0, 128
        %1080 = vxpose.xlu0.c.b16.cont [5/8] 0, 128
        %1081 = vxpose.xlu0.c.b16.cont [6/8] 0, 128
        %1082 = vxpose.xlu0.c.b16.cont [7/8] 0, 128
        %1083 = vxpose.xlu0.c.b16.end [8/8] 0, 128
        %v1084 = vpop.trf.xlu0
        %v1085 = vpop.trf.xlu0
        %v1086 = vpop.trf.xlu0
        %v1087 = vpop.trf.xlu0
        %v1088 = vpop.trf.xlu0
        %v1089 = vpop.trf.xlu0
        %v1090 = vpop.trf.xlu0
        %v1091 = vpop.trf.xlu0
        %v1092 = vcombine.low %v972, %v1036
        %v1094 = vunpack.c.l.s4 1983009808
        %v1095 = vunpack.c.0.s8 %v1094
        %v1096 = vlaneseq
        %v1097 = vshrl.u32 %v1096, 7
        %v1098 = vsub.s32 %v1095, %v1097
        %v1099 = vrot.slane %v1092, %v1098
        %v1100 = vcombine.low %v1004, %v1068
        %v1102 = vunpack.c.l.s4 1983009808
        %v1103 = vunpack.c.0.s8 %v1102
        %v1104 = vlaneseq
        %v1105 = vshrl.u32 %v1104, 7
        %v1106 = vsub.s32 %v1103, %v1105
        %v1107 = vrot.slane %v1100, %v1106
        %v1108 = vcombine.low %v1099, %v1107
        %v1109 = vcombine.high %v1099, %v1107
        %v1111 = vunpack.c.l.s4 1934713408
        %v1112 = vunpack.c.0.s8 %v1111
        %v1113 = vlaneseq
        %v1114 = vshrl.u32 %v1113, 7
        %v1115 = vsub.s32 %v1112, %v1114
        %v1116 = vrot.slane %v1108, %v1115
        %v1118 = vunpack.c.l.s4 1934713408
        %v1119 = vunpack.c.0.s8 %v1118
        %v1120 = vlaneseq
        %v1121 = vshrl.u32 %v1120, 7
        %v1122 = vsub.s32 %v1119, %v1121
        %v1123 = vrot.slane %v1109, %v1122
        %v1124 = vcombine.high %v1116, 0
        %v1125 = vcombine.high %v1123, 0
        %v1126 = vcombine.low %v988, %v1052
        %v1128 = vunpack.c.l.s4 1983009808
        %v1129 = vunpack.c.0.s8 %v1128
        %v1130 = vlaneseq
        %v1131 = vshrl.u32 %v1130, 7
        %v1132 = vsub.s32 %v1129, %v1131
        %v1133 = vrot.slane %v1126, %v1132
        %v1134 = vcombine.low %v1020, %v1084
        %v1136 = vunpack.c.l.s4 1983009808
        %v1137 = vunpack.c.0.s8 %v1136
        %v1138 = vlaneseq
        %v1139 = vshrl.u32 %v1138, 7
        %v1140 = vsub.s32 %v1137, %v1139
        %v1141 = vrot.slane %v1134, %v1140
        %v1142 = vcombine.low %v1133, %v1141
        %v1143 = vcombine.high %v1133, %v1141
        %v1145 = vunpack.c.l.s4 1934713408
        %v1146 = vunpack.c.0.s8 %v1145
        %v1147 = vlaneseq
        %v1148 = vshrl.u32 %v1147, 7
        %v1149 = vsub.s32 %v1146, %v1148
        %v1150 = vrot.slane %v1142, %v1149
        %v1152 = vunpack.c.l.s4 1934713408
        %v1153 = vunpack.c.0.s8 %v1152
        %v1154 = vlaneseq
        %v1155 = vshrl.u32 %v1154, 7
        %v1156 = vsub.s32 %v1153, %v1155
        %v1157 = vrot.slane %v1143, %v1156
        %v1158 = vcombine.high %v1150, 0
        %v1159 = vcombine.high %v1157, 0
        %v1162 = vpack.i.b16 %v1150, %v1116
        %v1164 = vshrl.u32 %v1116, 16
        %v1165 = vshrl.u32 %v1150, 16
        %v1166 = vpack.i.b16 %v1165, %v1164
        %v1170 = vpack.i.b16 %v1158, %v1124
        %v1172 = vshrl.u32 %v1124, 16
        %v1173 = vshrl.u32 %v1158, 16
        %v1174 = vpack.i.b16 %v1173, %v1172
        %v1178 = vpack.i.b16 %v1157, %v1123
        %v1180 = vshrl.u32 %v1123, 16
        %v1181 = vshrl.u32 %v1157, 16
        %v1182 = vpack.i.b16 %v1181, %v1180
        %v1186 = vpack.i.b16 %v1159, %v1125
        %v1188 = vshrl.u32 %v1125, 16
        %v1189 = vshrl.u32 %v1159, 16
        %v1190 = vpack.i.b16 %v1189, %v1188
        %1192 = vxpose.xlu0.c.b16.start [1/8] %v1162, 128
        %1193 = vxpose.xlu0.c.b16.cont [2/8] 0, 128
        %1194 = vxpose.xlu0.c.b16.cont [3/8] 0, 128
        %1195 = vxpose.xlu0.c.b16.cont [4/8] 0, 128
        %1196 = vxpose.xlu0.c.b16.cont [5/8] 0, 128
        %1197 = vxpose.xlu0.c.b16.cont [6/8] 0, 128
        %1198 = vxpose.xlu0.c.b16.cont [7/8] 0, 128
        %1199 = vxpose.xlu0.c.b16.end [8/8] 0, 128
        %v1200 = vpop.trf.xlu0
        %v1201 = vpop.trf.xlu0
        %v1202 = vpop.trf.xlu0
        %v1203 = vpop.trf.xlu0
        %v1204 = vpop.trf.xlu0
        %v1205 = vpop.trf.xlu0
        %v1206 = vpop.trf.xlu0
        %v1207 = vpop.trf.xlu0
        %1208 = vxpose.xlu0.c.b16.start [1/8] %v1166, 128
        %1209 = vxpose.xlu0.c.b16.cont [2/8] 0, 128
        %1210 = vxpose.xlu0.c.b16.cont [3/8] 0, 128
        %1211 = vxpose.xlu0.c.b16.cont [4/8] 0, 128
        %1212 = vxpose.xlu0.c.b16.cont [5/8] 0, 128
        %1213 = vxpose.xlu0.c.b16.cont [6/8] 0, 128
        %1214 = vxpose.xlu0.c.b16.cont [7/8] 0, 128
        %1215 = vxpose.xlu0.c.b16.end [8/8] 0, 128
        %v1216 = vpop.trf.xlu0
        %v1217 = vpop.trf.xlu0
        %v1218 = vpop.trf.xlu0
        %v1219 = vpop.trf.xlu0
        %v1220 = vpop.trf.xlu0
        %v1221 = vpop.trf.xlu0
        %v1222 = vpop.trf.xlu0
        %v1223 = vpop.trf.xlu0
        %1224 = vxpose.xlu0.c.b16.start [1/8] %v1170, 128
        %1225 = vxpose.xlu0.c.b16.cont [2/8] 0, 128
        %1226 = vxpose.xlu0.c.b16.cont [3/8] 0, 128
        %1227 = vxpose.xlu0.c.b16.cont [4/8] 0, 128
        %1228 = vxpose.xlu0.c.b16.cont [5/8] 0, 128
        %1229 = vxpose.xlu0.c.b16.cont [6/8] 0, 128
        %1230 = vxpose.xlu0.c.b16.cont [7/8] 0, 128
        %1231 = vxpose.xlu0.c.b16.end [8/8] 0, 128
        %v1232 = vpop.trf.xlu0
        %v1233 = vpop.trf.xlu0
        %v1234 = vpop.trf.xlu0
        %v1235 = vpop.trf.xlu0
        %v1236 = vpop.trf.xlu0
        %v1237 = vpop.trf.xlu0
        %v1238 = vpop.trf.xlu0
        %v1239 = vpop.trf.xlu0
        %1240 = vxpose.xlu0.c.b16.start [1/8] %v1174, 128
        %1241 = vxpose.xlu0.c.b16.cont [2/8] 0, 128
        %1242 = vxpose.xlu0.c.b16.cont [3/8] 0, 128
        %1243 = vxpose.xlu0.c.b16.cont [4/8] 0, 128
        %1244 = vxpose.xlu0.c.b16.cont [5/8] 0, 128
        %1245 = vxpose.xlu0.c.b16.cont [6/8] 0, 128
        %1246 = vxpose.xlu0.c.b16.cont [7/8] 0, 128
        %1247 = vxpose.xlu0.c.b16.end [8/8] 0, 128
        %v1248 = vpop.trf.xlu0
        %v1249 = vpop.trf.xlu0
        %v1250 = vpop.trf.xlu0
        %v1251 = vpop.trf.xlu0
        %v1252 = vpop.trf.xlu0
        %v1253 = vpop.trf.xlu0
        %v1254 = vpop.trf.xlu0
        %v1255 = vpop.trf.xlu0
        %1256 = vxpose.xlu0.c.b16.start [1/8] %v1178, 128
        %1257 = vxpose.xlu0.c.b16.cont [2/8] 0, 128
        %1258 = vxpose.xlu0.c.b16.cont [3/8] 0, 128
        %1259 = vxpose.xlu0.c.b16.cont [4/8] 0, 128
        %1260 = vxpose.xlu0.c.b16.cont [5/8] 0, 128
        %1261 = vxpose.xlu0.c.b16.cont [6/8] 0, 128
        %1262 = vxpose.xlu0.c.b16.cont [7/8] 0, 128
        %1263 = vxpose.xlu0.c.b16.end [8/8] 0, 128
        %v1264 = vpop.trf.xlu0
        %v1265 = vpop.trf.xlu0
        %v1266 = vpop.trf.xlu0
        %v1267 = vpop.trf.xlu0
        %v1268 = vpop.trf.xlu0
        %v1269 = vpop.trf.xlu0
        %v1270 = vpop.trf.xlu0
        %v1271 = vpop.trf.xlu0
        %1272 = vxpose.xlu0.c.b16.start [1/8] %v1182, 128
        %1273 = vxpose.xlu0.c.b16.cont [2/8] 0, 128
        %1274 = vxpose.xlu0.c.b16.cont [3/8] 0, 128
        %1275 = vxpose.xlu0.c.b16.cont [4/8] 0, 128
        %1276 = vxpose.xlu0.c.b16.cont [5/8] 0, 128
        %1277 = vxpose.xlu0.c.b16.cont [6/8] 0, 128
        %1278 = vxpose.xlu0.c.b16.cont [7/8] 0, 128
        %1279 = vxpose.xlu0.c.b16.end [8/8] 0, 128
        %v1280 = vpop.trf.xlu0
        %v1281 = vpop.trf.xlu0
        %v1282 = vpop.trf.xlu0
        %v1283 = vpop.trf.xlu0
        %v1284 = vpop.trf.xlu0
        %v1285 = vpop.trf.xlu0
        %v1286 = vpop.trf.xlu0
        %v1287 = vpop.trf.xlu0
        %1288 = vxpose.xlu0.c.b16.start [1/8] %v1186, 128
        %1289 = vxpose.xlu0.c.b16.cont [2/8] 0, 128
        %1290 = vxpose.xlu0.c.b16.cont [3/8] 0, 128
        %1291 = vxpose.xlu0.c.b16.cont [4/8] 0, 128
        %1292 = vxpose.xlu0.c.b16.cont [5/8] 0, 128
        %1293 = vxpose.xlu0.c.b16.cont [6/8] 0, 128
        %1294 = vxpose.xlu0.c.b16.cont [7/8] 0, 128
        %1295 = vxpose.xlu0.c.b16.end [8/8] 0, 128
        %v1296 = vpop.trf.xlu0
        %v1297 = vpop.trf.xlu0
        %v1298 = vpop.trf.xlu0
        %v1299 = vpop.trf.xlu0
        %v1300 = vpop.trf.xlu0
        %v1301 = vpop.trf.xlu0
        %v1302 = vpop.trf.xlu0
        %v1303 = vpop.trf.xlu0
        %1304 = vxpose.xlu0.c.b16.start [1/8] %v1190, 128
        %1305 = vxpose.xlu0.c.b16.cont [2/8] 0, 128
        %1306 = vxpose.xlu0.c.b16.cont [3/8] 0, 128
        %1307 = vxpose.xlu0.c.b16.cont [4/8] 0, 128
        %1308 = vxpose.xlu0.c.b16.cont [5/8] 0, 128
        %1309 = vxpose.xlu0.c.b16.cont [6/8] 0, 128
        %1310 = vxpose.xlu0.c.b16.cont [7/8] 0, 128
        %1311 = vxpose.xlu0.c.b16.end [8/8] 0, 128
        %v1312 = vpop.trf.xlu0
        %v1313 = vpop.trf.xlu0
        %v1314 = vpop.trf.xlu0
        %v1315 = vpop.trf.xlu0
        %v1316 = vpop.trf.xlu0
        %v1317 = vpop.trf.xlu0
        %v1318 = vpop.trf.xlu0
        %v1319 = vpop.trf.xlu0
        %v1320 = vcombine.low %v1200, %v1264
        %v1322 = vunpack.c.l.s4 1983009808
        %v1323 = vunpack.c.0.s8 %v1322
        %v1324 = vlaneseq
        %v1325 = vshrl.u32 %v1324, 7
        %v1326 = vsub.s32 %v1323, %v1325
        %v1327 = vrot.slane %v1320, %v1326
        %v1328 = vcombine.low %v1232, %v1296
        %v1330 = vunpack.c.l.s4 1983009808
        %v1331 = vunpack.c.0.s8 %v1330
        %v1332 = vlaneseq
        %v1333 = vshrl.u32 %v1332, 7
        %v1334 = vsub.s32 %v1331, %v1333
        %v1335 = vrot.slane %v1328, %v1334
        %v1336 = vcombine.low %v1327, %v1335
        %v1338 = vunpack.c.l.s4 1934713408
        %v1339 = vunpack.c.0.s8 %v1338
        %v1340 = vlaneseq
        %v1341 = vshrl.u32 %v1340, 7
        %v1342 = vsub.s32 %v1339, %v1341
        %v1343 = vrot.slane %v1336, %v1342
        %v1344 = vcombine.high %v1343, 0
        %v1345 = vcombine.low %v1216, %v1280
        %v1347 = vunpack.c.l.s4 1983009808
        %v1348 = vunpack.c.0.s8 %v1347
        %v1349 = vlaneseq
        %v1350 = vshrl.u32 %v1349, 7
        %v1351 = vsub.s32 %v1348, %v1350
        %v1352 = vrot.slane %v1345, %v1351
        %v1353 = vcombine.low %v1248, %v1312
        %v1355 = vunpack.c.l.s4 1983009808
        %v1356 = vunpack.c.0.s8 %v1355
        %v1357 = vlaneseq
        %v1358 = vshrl.u32 %v1357, 7
        %v1359 = vsub.s32 %v1356, %v1358
        %v1360 = vrot.slane %v1353, %v1359
        %v1361 = vcombine.low %v1352, %v1360
        %v1363 = vunpack.c.l.s4 1934713408
        %v1364 = vunpack.c.0.s8 %v1363
        %v1365 = vlaneseq
        %v1366 = vshrl.u32 %v1365, 7
        %v1367 = vsub.s32 %v1364, %v1366
        %v1368 = vrot.slane %v1361, %v1367
        %v1369 = vcombine.high %v1368, 0
        %v1372 = vpack.i.b16 %v1368, %v1343
        %v1373 = vshrl.u32 %v1343, 16
        %v1374 = vshrl.u32 %v1368, 16
        %v1375 = vpack.i.b16 %v1374, %v1373
        %v1378 = vpack.i.b16 %v1369, %v1344
        %v1379 = vshrl.u32 %v1344, 16
        %v1380 = vshrl.u32 %v1369, 16
        %v1381 = vpack.i.b16 %v1380, %v1379
        %vm1382 = vcmask 64512
        %v1384 = vsel %vm1382, %v954, 0
        %vm1386 = vcmask 1043456
        %v1388 = vsel %vm1386, %v1372, 0
        %1390 = vmatprep.subr.bf16.mxu0 0
        %1391 = vmatpush1.bf16.msra.mxu0 %v1388
        %1392 = vmatprep.subr.bf16.mxu0 0
        %1393 = vmatpush1.bf16.msra.mxu0 0
        %1394 = vmatprep.subr.bf16.mxu0 0
        %1395 = vmatpush1.bf16.msra.mxu0 0
        %1396 = vmatprep.subr.bf16.mxu0 0
        %1397 = vmatpush1.bf16.msra.mxu0 0
        %1398 = vmatprep.subr.bf16.mxu0 0
        %1399 = vmatpush1.bf16.msra.mxu0 0
        %1400 = vmatprep.subr.bf16.mxu0 0
        %1401 = vmatpush1.bf16.msra.mxu0 0
        %1402 = vmatprep.subr.bf16.mxu0 0
        %1403 = vmatpush1.bf16.msra.mxu0 0
        %1404 = vmatprep.subr.bf16.mxu0 0
        %1405 = vmatpush1.bf16.msra.mxu0 0
        %1406 = vmatprep.subr.bf16.mxu0 0
        %1407 = vmatpush1.bf16.msra.mxu0 0
        %1408 = vmatprep.subr.bf16.mxu0 0
        %1409 = vmatpush1.bf16.msra.mxu0 0
        %1410 = vmatprep.subr.bf16.mxu0 0
        %1411 = vmatpush1.bf16.msra.mxu0 0
        %1412 = vmatprep.subr.bf16.mxu0 0
        %1413 = vmatpush1.bf16.msra.mxu0 0
        %1414 = vmatprep.subr.bf16.mxu0 0
        %1415 = vmatpush1.bf16.msra.mxu0 0
        %1416 = vmatprep.subr.bf16.mxu0 0
        %1417 = vmatpush1.bf16.msra.mxu0 0
        %1418 = vmatprep.subr.bf16.mxu0 0
        %1419 = vmatpush1.bf16.msra.mxu0 0
        %1420 = vmatprep.subr.bf16.mxu0 0
        %1421 = vmatpush1.bf16.msra.mxu0 0
        %1422 = vmatprep.mubr.bf16.mxu0 0
        %1423 = vmatmul.mubr.bf16.gmra.mrb[0].mxu0 %v1384
        %v1424 = vpop.f32.mrb[0].mxu0
        %v1425 = vadd.f32 0.0, %v1424
        %v1426 = vpop.f32.mrb[0].mxu0
        %v1427 = vpop.f32.mrb[0].mxu0
        %v1428 = vpop.f32.mrb[0].mxu0
        %1429 = vdwg.mxu0
        %v1431 = vsel %vm1382, %v957, 0
        %v1434 = vsel %vm1386, %v1375, 0
        %1436 = vmatprep.subr.bf16.mxu0 0
        %1437 = vmatpush1.bf16.msra.mxu0 %v1434
        %1438 = vmatprep.subr.bf16.mxu0 0
        %1439 = vmatpush1.bf16.msra.mxu0 0
        %1440 = vmatprep.subr.bf16.mxu0 0
        %1441 = vmatpush1.bf16.msra.mxu0 0
        %1442 = vmatprep.subr.bf16.mxu0 0
        %1443 = vmatpush1.bf16.msra.mxu0 0
        %1444 = vmatprep.subr.bf16.mxu0 0
        %1445 = vmatpush1.bf16.msra.mxu0 0
        %1446 = vmatprep.subr.bf16.mxu0 0
        %1447 = vmatpush1.bf16.msra.mxu0 0
        %1448 = vmatprep.subr.bf16.mxu0 0
        %1449 = vmatpush1.bf16.msra.mxu0 0
        %1450 = vmatprep.subr.bf16.mxu0 0
        %1451 = vmatpush1.bf16.msra.mxu0 0
        %1452 = vmatprep.subr.bf16.mxu0 0
        %1453 = vmatpush1.bf16.msra.mxu0 0
        %1454 = vmatprep.subr.bf16.mxu0 0
        %1455 = vmatpush1.bf16.msra.mxu0 0
        %1456 = vmatprep.subr.bf16.mxu0 0
        %1457 = vmatpush1.bf16.msra.mxu0 0
        %1458 = vmatprep.subr.bf16.mxu0 0
        %1459 = vmatpush1.bf16.msra.mxu0 0
        %1460 = vmatprep.subr.bf16.mxu0 0
        %1461 = vmatpush1.bf16.msra.mxu0 0
        %1462 = vmatprep.subr.bf16.mxu0 0
        %1463 = vmatpush1.bf16.msra.mxu0 0
        %1464 = vmatprep.subr.bf16.mxu0 0
        %1465 = vmatpush1.bf16.msra.mxu0 0
        %1466 = vmatprep.subr.bf16.mxu0 0
        %1467 = vmatpush1.bf16.msra.mxu0 0
        %1468 = vmatprep.mubr.bf16.mxu0 0
        %1469 = vmatmul.mubr.bf16.gmra.mrb[0].mxu0 %v1431
        %v1470 = vpop.f32.mrb[0].mxu0
        %v1471 = vadd.f32 0.0, %v1470
        %v1472 = vpop.f32.mrb[0].mxu0
        %v1473 = vpop.f32.mrb[0].mxu0
        %v1474 = vpop.f32.mrb[0].mxu0
        %1475 = vdwg.mxu0
        %v1477 = vsel %vm1382, %v960, 0
        %v1480 = vsel %vm1386, %v1378, 0
        %1482 = vmatprep.subr.bf16.mxu0 0
        %1483 = vmatpush1.bf16.msra.mxu0 %v1480
        %1484 = vmatprep.subr.bf16.mxu0 0
        %1485 = vmatpush1.bf16.msra.mxu0 0
        %1486 = vmatprep.subr.bf16.mxu0 0
        %1487 = vmatpush1.bf16.msra.mxu0 0
        %1488 = vmatprep.subr.bf16.mxu0 0
        %1489 = vmatpush1.bf16.msra.mxu0 0
        %1490 = vmatprep.subr.bf16.mxu0 0
        %1491 = vmatpush1.bf16.msra.mxu0 0
        %1492 = vmatprep.subr.bf16.mxu0 0
        %1493 = vmatpush1.bf16.msra.mxu0 0
        %1494 = vmatprep.subr.bf16.mxu0 0
        %1495 = vmatpush1.bf16.msra.mxu0 0
        %1496 = vmatprep.subr.bf16.mxu0 0
        %1497 = vmatpush1.bf16.msra.mxu0 0
        %1498 = vmatprep.subr.bf16.mxu0 0
        %1499 = vmatpush1.bf16.msra.mxu0 0
        %1500 = vmatprep.subr.bf16.mxu0 0
        %1501 = vmatpush1.bf16.msra.mxu0 0
        %1502 = vmatprep.subr.bf16.mxu0 0
        %1503 = vmatpush1.bf16.msra.mxu0 0
        %1504 = vmatprep.subr.bf16.mxu0 0
        %1505 = vmatpush1.bf16.msra.mxu0 0
        %1506 = vmatprep.subr.bf16.mxu0 0
        %1507 = vmatpush1.bf16.msra.mxu0 0
        %1508 = vmatprep.subr.bf16.mxu0 0
        %1509 = vmatpush1.bf16.msra.mxu0 0
        %1510 = vmatprep.subr.bf16.mxu0 0
        %1511 = vmatpush1.bf16.msra.mxu0 0
        %1512 = vmatprep.subr.bf16.mxu0 0
        %1513 = vmatpush1.bf16.msra.mxu0 0
        %1514 = vmatprep.mubr.bf16.mxu0 0
        %1515 = vmatmul.mubr.bf16.gmra.mrb[0].mxu0 %v1477
        %v1516 = vpop.f32.mrb[0].mxu0
        %v1517 = vadd.f32 0.0, %v1516
        %v1518 = vpop.f32.mrb[0].mxu0
        %v1519 = vpop.f32.mrb[0].mxu0
        %v1520 = vpop.f32.mrb[0].mxu0
        %1521 = vdwg.mxu0
        %v1523 = vsel %vm1382, %v963, 0
        %v1526 = vsel %vm1386, %v1381, 0
        %1528 = vmatprep.subr.bf16.mxu0 0
        %1529 = vmatpush1.bf16.msra.mxu0 %v1526
        %1530 = vmatprep.subr.bf16.mxu0 0
        %1531 = vmatpush1.bf16.msra.mxu0 0
        %1532 = vmatprep.subr.bf16.mxu0 0
        %1533 = vmatpush1.bf16.msra.mxu0 0
        %1534 = vmatprep.subr.bf16.mxu0 0
        %1535 = vmatpush1.bf16.msra.mxu0 0
        %1536 = vmatprep.subr.bf16.mxu0 0
        %1537 = vmatpush1.bf16.msra.mxu0 0
        %1538 = vmatprep.subr.bf16.mxu0 0
        %1539 = vmatpush1.bf16.msra.mxu0 0
        %1540 = vmatprep.subr.bf16.mxu0 0
        %1541 = vmatpush1.bf16.msra.mxu0 0
        %1542 = vmatprep.subr.bf16.mxu0 0
        %1543 = vmatpush1.bf16.msra.mxu0 0
        %1544 = vmatprep.subr.bf16.mxu0 0
        %1545 = vmatpush1.bf16.msra.mxu0 0
        %1546 = vmatprep.subr.bf16.mxu0 0
        %1547 = vmatpush1.bf16.msra.mxu0 0
        %1548 = vmatprep.subr.bf16.mxu0 0
        %1549 = vmatpush1.bf16.msra.mxu0 0
        %1550 = vmatprep.subr.bf16.mxu0 0
        %1551 = vmatpush1.bf16.msra.mxu0 0
        %1552 = vmatprep.subr.bf16.mxu0 0
        %1553 = vmatpush1.bf16.msra.mxu0 0
        %1554 = vmatprep.subr.bf16.mxu0 0
        %1555 = vmatpush1.bf16.msra.mxu0 0
        %1556 = vmatprep.subr.bf16.mxu0 0
        %1557 = vmatpush1.bf16.msra.mxu0 0
        %1558 = vmatprep.subr.bf16.mxu0 0
        %1559 = vmatpush1.bf16.msra.mxu0 0
        %1560 = vmatprep.mubr.bf16.mxu0 0
        %1561 = vmatmul.mubr.bf16.gmra.mrb[0].mxu0 %v1523
        %v1562 = vpop.f32.mrb[0].mxu0
        %v1563 = vadd.f32 0.0, %v1562
        %v1564 = vpop.f32.mrb[0].mxu0
        %v1565 = vpop.f32.mrb[0].mxu0
        %v1566 = vpop.f32.mrb[0].mxu0
        %1567 = vdwg.mxu0
        %v1568 = vsel %vm1382, %v1425, -inf
        %1569 = vmax.xlane.f32.xlu0 %v1568
        %v1570 = vpop.xlane.xlu0 %1569
        %v1571 = vsel %vm1382, %v1471, -inf
        %1572 = vmax.xlane.f32.xlu0 %v1571
        %v1573 = vpop.xlane.xlu0 %1572
        %v1574 = vsel %vm1382, %v1517, -inf
        %1575 = vmax.xlane.f32.xlu0 %v1574
        %v1576 = vpop.xlane.xlu0 %1575
        %v1577 = vsel %vm1382, %v1563, -inf
        %1578 = vmax.xlane.f32.xlu0 %v1577
        %v1579 = vpop.xlane.xlu0 %1578
        %v1580 = vsub.f32 %v1425, %v1570
        %v1581 = vsub.f32 %v1471, %v1573
        %v1582 = vsub.f32 %v1517, %v1576
        %v1583 = vsub.f32 %v1563, %v1579
        %v1584 = vmul.f32 %v1580, 1.442695
        %v1585 = vpow.pop %v1584
        %v1586 = vmul.f32 %v1581, 1.442695
        %v1587 = vpow.pop %v1586
        %v1588 = vmul.f32 %v1582, 1.442695
        %v1589 = vpow.pop %v1588
        %v1590 = vmul.f32 %v1583, 1.442695
        %v1591 = vpow.pop %v1590
        %v1592 = vsel %vm1382, %v1585, 0.0
        %1593 = vadd.xlane.f32.xlu0 %v1592
        %v1594 = vpop.xlane.xlu0 %1593
        %v1595 = vsel %vm1382, %v1587, 0.0
        %1596 = vadd.xlane.f32.xlu0 %v1595
        %v1597 = vpop.xlane.xlu0 %1596
        %v1598 = vsel %vm1382, %v1589, 0.0
        %1599 = vadd.xlane.f32.xlu0 %v1598
        %v1600 = vpop.xlane.xlu0 %1599
        %v1601 = vsel %vm1382, %v1591, 0.0
        %1602 = vadd.xlane.f32.xlu0 %v1601
        %v1603 = vpop.xlane.xlu0 %1602
        %v1604 = vrcp.pop %v1594
        %v1605 = vrcp.pop %v1597
        %v1606 = vrcp.pop %v1600
        %v1607 = vrcp.pop %v1603
        %v1608 = vmul.f32 %v1585, %v1604
        %v1609 = vmul.f32 %v1587, %v1605
        %v1610 = vmul.f32 %v1589, %v1606
        %v1611 = vmul.f32 %v1591, %v1607
        %v1612 = vpack.c.bf16 %v1608, %v1608
        %v1613 = vpack.c.bf16 %v1609, %v1609
        %v1614 = vpack.c.bf16 %v1610, %v1610
        %v1615 = vpack.c.bf16 %v1611, %v1611
        %v1616 = vld [vmem:[#allocation4] sm:$0x3]
        %v1617 = vld [vmem:[#allocation4 + $0x2] sm:$0x3]
        %v1618 = vld [vmem:[#allocation4 + $0x4] sm:$0x3]
        %v1619 = vld [vmem:[#allocation4 + $0x6] sm:$0x3]
        %v1620 = vld [vmem:[#allocation4 + $0x8] sm:$0x3]
        %v1621 = vld [vmem:[#allocation4 + $0xa] sm:$0x3]
        %v1622 = vld [vmem:[#allocation4 + $0xc] sm:$0x3]
        %v1623 = vld [vmem:[#allocation4 + $0xe] sm:$0x3]
        %v1624 = vcombine.low %v1616, %v1618
        %v1626 = vunpack.c.l.s4 1934713408
        %v1627 = vunpack.c.0.s8 %v1626
        %v1628 = vlaneseq
        %v1629 = vshrl.u32 %v1628, 7
        %v1630 = vsub.s32 %v1627, %v1629
        %v1631 = vrot.slane %v1624, %v1630
        %v1632 = vcombine.high %v1631, 0
        %v1633 = vcombine.low %v1617, %v1619
        %v1635 = vunpack.c.l.s4 1934713408
        %v1636 = vunpack.c.0.s8 %v1635
        %v1637 = vlaneseq
        %v1638 = vshrl.u32 %v1637, 7
        %v1639 = vsub.s32 %v1636, %v1638
        %v1640 = vrot.slane %v1633, %v1639
        %v1641 = vcombine.high %v1640, 0
        %v1642 = vcombine.low %v1620, %v1622
        %v1644 = vunpack.c.l.s4 1934713408
        %v1645 = vunpack.c.0.s8 %v1644
        %v1646 = vlaneseq
        %v1647 = vshrl.u32 %v1646, 7
        %v1648 = vsub.s32 %v1645, %v1647
        %v1649 = vrot.slane %v1642, %v1648
        %v1650 = vcombine.high %v1649, 0
        %v1651 = vcombine.low %v1621, %v1623
        %v1653 = vunpack.c.l.s4 1934713408
        %v1654 = vunpack.c.0.s8 %v1653
        %v1655 = vlaneseq
        %v1656 = vshrl.u32 %v1655, 7
        %v1657 = vsub.s32 %v1654, %v1656
        %v1658 = vrot.slane %v1651, %v1657
        %v1659 = vcombine.high %v1658, 0
        %v1662 = vpack.i.b16 %v1640, %v1631
        %v1663 = vshrl.u32 %v1631, 16
        %v1664 = vshrl.u32 %v1640, 16
        %v1665 = vpack.i.b16 %v1664, %v1663
        %v1668 = vpack.i.b16 %v1641, %v1632
        %v1669 = vshrl.u32 %v1632, 16
        %v1670 = vshrl.u32 %v1641, 16
        %v1671 = vpack.i.b16 %v1670, %v1669
        %v1674 = vpack.i.b16 %v1658, %v1649
        %v1675 = vshrl.u32 %v1649, 16
        %v1676 = vshrl.u32 %v1658, 16
        %v1677 = vpack.i.b16 %v1676, %v1675
        %v1680 = vpack.i.b16 %v1659, %v1650
        %v1681 = vshrl.u32 %v1650, 16
        %v1682 = vshrl.u32 %v1659, 16
        %v1683 = vpack.i.b16 %v1682, %v1681
        %v1684 = vcombine.low %v1662, %v1674
        %v1686 = vunpack.c.l.s4 1983009808
        %v1687 = vunpack.c.0.s8 %v1686
        %v1688 = vlaneseq
        %v1689 = vshrl.u32 %v1688, 7
        %v1690 = vsub.s32 %v1687, %v1689
        %v1691 = vrot.slane %v1684, %v1690
        %v1693 = vsel %vm1382, %v1612, 0
        %v1696 = vsel %vm1386, %v1691, 0
        %1698 = vmatprep.subr.bf16.mxu0 0
        %1699 = vmatpush1.bf16.msra.mxu0 %v1696
        %1700 = vmatprep.subr.bf16.mxu0 0
        %1701 = vmatpush1.bf16.msra.mxu0 0
        %1702 = vmatprep.subr.bf16.mxu0 0
        %1703 = vmatpush1.bf16.msra.mxu0 0
        %1704 = vmatprep.subr.bf16.mxu0 0
        %1705 = vmatpush1.bf16.msra.mxu0 0
        %1706 = vmatprep.subr.bf16.mxu0 0
        %1707 = vmatpush1.bf16.msra.mxu0 0
        %1708 = vmatprep.subr.bf16.mxu0 0
        %1709 = vmatpush1.bf16.msra.mxu0 0
        %1710 = vmatprep.subr.bf16.mxu0 0
        %1711 = vmatpush1.bf16.msra.mxu0 0
        %1712 = vmatprep.subr.bf16.mxu0 0
        %1713 = vmatpush1.bf16.msra.mxu0 0
        %1714 = vmatprep.subr.bf16.mxu0 0
        %1715 = vmatpush1.bf16.msra.mxu0 0
        %1716 = vmatprep.subr.bf16.mxu0 0
        %1717 = vmatpush1.bf16.msra.mxu0 0
        %1718 = vmatprep.subr.bf16.mxu0 0
        %1719 = vmatpush1.bf16.msra.mxu0 0
        %1720 = vmatprep.subr.bf16.mxu0 0
        %1721 = vmatpush1.bf16.msra.mxu0 0
        %1722 = vmatprep.subr.bf16.mxu0 0
        %1723 = vmatpush1.bf16.msra.mxu0 0
        %1724 = vmatprep.subr.bf16.mxu0 0
        %1725 = vmatpush1.bf16.msra.mxu0 0
        %1726 = vmatprep.subr.bf16.mxu0 0
        %1727 = vmatpush1.bf16.msra.mxu0 0
        %1728 = vmatprep.subr.bf16.mxu0 0
        %1729 = vmatpush1.bf16.msra.mxu0 0
        %1730 = vmatprep.mubr.bf16.mxu0 0
        %1731 = vmatmul.mubr.bf16.gmra.mrb[0].mxu0 %v1693
        %v1732 = vpop.f32.mrb[0].mxu0
        %v1733 = vadd.f32 0.0, %v1732
        %v1734 = vpop.f32.mrb[0].mxu0
        %v1735 = vpop.f32.mrb[0].mxu0
        %v1736 = vpop.f32.mrb[0].mxu0
        %1737 = vdwg.mxu0
        %v1738 = vcombine.low %v1665, %v1677
        %v1740 = vunpack.c.l.s4 1983009808
        %v1741 = vunpack.c.0.s8 %v1740
        %v1742 = vlaneseq
        %v1743 = vshrl.u32 %v1742, 7
        %v1744 = vsub.s32 %v1741, %v1743
        %v1745 = vrot.slane %v1738, %v1744
        %v1747 = vsel %vm1382, %v1613, 0
        %v1750 = vsel %vm1386, %v1745, 0
        %1752 = vmatprep.subr.bf16.mxu0 0
        %1753 = vmatpush1.bf16.msra.mxu0 %v1750
        %1754 = vmatprep.subr.bf16.mxu0 0
        %1755 = vmatpush1.bf16.msra.mxu0 0
        %1756 = vmatprep.subr.bf16.mxu0 0
        %1757 = vmatpush1.bf16.msra.mxu0 0
        %1758 = vmatprep.subr.bf16.mxu0 0
        %1759 = vmatpush1.bf16.msra.mxu0 0
        %1760 = vmatprep.subr.bf16.mxu0 0
        %1761 = vmatpush1.bf16.msra.mxu0 0
        %1762 = vmatprep.subr.bf16.mxu0 0
        %1763 = vmatpush1.bf16.msra.mxu0 0
        %1764 = vmatprep.subr.bf16.mxu0 0
        %1765 = vmatpush1.bf16.msra.mxu0 0
        %1766 = vmatprep.subr.bf16.mxu0 0
        %1767 = vmatpush1.bf16.msra.mxu0 0
        %1768 = vmatprep.subr.bf16.mxu0 0
        %1769 = vmatpush1.bf16.msra.mxu0 0
        %1770 = vmatprep.subr.bf16.mxu0 0
        %1771 = vmatpush1.bf16.msra.mxu0 0
        %1772 = vmatprep.subr.bf16.mxu0 0
        %1773 = vmatpush1.bf16.msra.mxu0 0
        %1774 = vmatprep.subr.bf16.mxu0 0
        %1775 = vmatpush1.bf16.msra.mxu0 0
        %1776 = vmatprep.subr.bf16.mxu0 0
        %1777 = vmatpush1.bf16.msra.mxu0 0
        %1778 = vmatprep.subr.bf16.mxu0 0
        %1779 = vmatpush1.bf16.msra.mxu0 0
        %1780 = vmatprep.subr.bf16.mxu0 0
        %1781 = vmatpush1.bf16.msra.mxu0 0
        %1782 = vmatprep.subr.bf16.mxu0 0
        %1783 = vmatpush1.bf16.msra.mxu0 0
        %1784 = vmatprep.mubr.bf16.mxu0 0
        %1785 = vmatmul.mubr.bf16.gmra.mrb[0].mxu0 %v1747
        %v1786 = vpop.f32.mrb[0].mxu0
        %v1787 = vadd.f32 0.0, %v1786
        %v1788 = vpop.f32.mrb[0].mxu0
        %v1789 = vpop.f32.mrb[0].mxu0
        %v1790 = vpop.f32.mrb[0].mxu0
        %1791 = vdwg.mxu0
        %v1792 = vcombine.low %v1668, %v1680
        %v1794 = vunpack.c.l.s4 1983009808
        %v1795 = vunpack.c.0.s8 %v1794
        %v1796 = vlaneseq
        %v1797 = vshrl.u32 %v1796, 7
        %v1798 = vsub.s32 %v1795, %v1797
        %v1799 = vrot.slane %v1792, %v1798
        %v1801 = vsel %vm1382, %v1614, 0
        %v1804 = vsel %vm1386, %v1799, 0
        %1806 = vmatprep.subr.bf16.mxu0 0
        %1807 = vmatpush1.bf16.msra.mxu0 %v1804
        %1808 = vmatprep.subr.bf16.mxu0 0
        %1809 = vmatpush1.bf16.msra.mxu0 0
        %1810 = vmatprep.subr.bf16.mxu0 0
        %1811 = vmatpush1.bf16.msra.mxu0 0
        %1812 = vmatprep.subr.bf16.mxu0 0
        %1813 = vmatpush1.bf16.msra.mxu0 0
        %1814 = vmatprep.subr.bf16.mxu0 0
        %1815 = vmatpush1.bf16.msra.mxu0 0
        %1816 = vmatprep.subr.bf16.mxu0 0
        %1817 = vmatpush1.bf16.msra.mxu0 0
        %1818 = vmatprep.subr.bf16.mxu0 0
        %1819 = vmatpush1.bf16.msra.mxu0 0
        %1820 = vmatprep.subr.bf16.mxu0 0
        %1821 = vmatpush1.bf16.msra.mxu0 0
        %1822 = vmatprep.subr.bf16.mxu0 0
        %1823 = vmatpush1.bf16.msra.mxu0 0
        %1824 = vmatprep.subr.bf16.mxu0 0
        %1825 = vmatpush1.bf16.msra.mxu0 0
        %1826 = vmatprep.subr.bf16.mxu0 0
        %1827 = vmatpush1.bf16.msra.mxu0 0
        %1828 = vmatprep.subr.bf16.mxu0 0
        %1829 = vmatpush1.bf16.msra.mxu0 0
        %1830 = vmatprep.subr.bf16.mxu0 0
        %1831 = vmatpush1.bf16.msra.mxu0 0
        %1832 = vmatprep.subr.bf16.mxu0 0
        %1833 = vmatpush1.bf16.msra.mxu0 0
        %1834 = vmatprep.subr.bf16.mxu0 0
        %1835 = vmatpush1.bf16.msra.mxu0 0
        %1836 = vmatprep.subr.bf16.mxu0 0
        %1837 = vmatpush1.bf16.msra.mxu0 0
        %1838 = vmatprep.mubr.bf16.mxu0 0
        %1839 = vmatmul.mubr.bf16.gmra.mrb[0].mxu0 %v1801
        %v1840 = vpop.f32.mrb[0].mxu0
        %v1841 = vadd.f32 0.0, %v1840
        %v1842 = vpop.f32.mrb[0].mxu0
        %v1843 = vpop.f32.mrb[0].mxu0
        %v1844 = vpop.f32.mrb[0].mxu0
        %1845 = vdwg.mxu0
        %v1846 = vcombine.low %v1671, %v1683
        %v1848 = vunpack.c.l.s4 1983009808
        %v1849 = vunpack.c.0.s8 %v1848
        %v1850 = vlaneseq
        %v1851 = vshrl.u32 %v1850, 7
        %v1852 = vsub.s32 %v1849, %v1851
        %v1853 = vrot.slane %v1846, %v1852
        %v1855 = vsel %vm1382, %v1615, 0
        %v1858 = vsel %vm1386, %v1853, 0
        %1860 = vmatprep.subr.bf16.mxu0 0
        %1861 = vmatpush1.bf16.msra.mxu0 %v1858
        %1862 = vmatprep.subr.bf16.mxu0 0
        %1863 = vmatpush1.bf16.msra.mxu0 0
        %1864 = vmatprep.subr.bf16.mxu0 0
        %1865 = vmatpush1.bf16.msra.mxu0 0
        %1866 = vmatprep.subr.bf16.mxu0 0
        %1867 = vmatpush1.bf16.msra.mxu0 0
        %1868 = vmatprep.subr.bf16.mxu0 0
        %1869 = vmatpush1.bf16.msra.mxu0 0
        %1870 = vmatprep.subr.bf16.mxu0 0
        %1871 = vmatpush1.bf16.msra.mxu0 0
        %1872 = vmatprep.subr.bf16.mxu0 0
        %1873 = vmatpush1.bf16.msra.mxu0 0
        %1874 = vmatprep.subr.bf16.mxu0 0
        %1875 = vmatpush1.bf16.msra.mxu0 0
        %1876 = vmatprep.subr.bf16.mxu0 0
        %1877 = vmatpush1.bf16.msra.mxu0 0
        %1878 = vmatprep.subr.bf16.mxu0 0
        %1879 = vmatpush1.bf16.msra.mxu0 0
        %1880 = vmatprep.subr.bf16.mxu0 0
        %1881 = vmatpush1.bf16.msra.mxu0 0
        %1882 = vmatprep.subr.bf16.mxu0 0
        %1883 = vmatpush1.bf16.msra.mxu0 0
        %1884 = vmatprep.subr.bf16.mxu0 0
        %1885 = vmatpush1.bf16.msra.mxu0 0
        %1886 = vmatprep.subr.bf16.mxu0 0
        %1887 = vmatpush1.bf16.msra.mxu0 0
        %1888 = vmatprep.subr.bf16.mxu0 0
        %1889 = vmatpush1.bf16.msra.mxu0 0
        %1890 = vmatprep.subr.bf16.mxu0 0
        %1891 = vmatpush1.bf16.msra.mxu0 0
        %1892 = vmatprep.mubr.bf16.mxu0 0
        %1893 = vmatmul.mubr.bf16.gmra.mrb[0].mxu0 %v1855
        %v1894 = vpop.f32.mrb[0].mxu0
        %v1895 = vadd.f32 0.0, %v1894
        %v1896 = vpop.f32.mrb[0].mxu0
        %v1897 = vpop.f32.mrb[0].mxu0
        %v1898 = vpop.f32.mrb[0].mxu0
        %1899 = vdwg.mxu0
        %v1900 = vcombine.low %v1733, %v1841
        %v1901 = vcombine.high %v1733, %v1841
        %v1903 = vunpack.c.l.s4 1983009808
        %v1904 = vunpack.c.0.s8 %v1903
        %v1905 = vlaneseq
        %v1906 = vshrl.u32 %v1905, 7
        %v1907 = vsub.s32 %v1904, %v1906
        %v1908 = vrot.slane %v1900, %v1907
        %v1910 = vunpack.c.l.s4 1983009808
        %v1911 = vunpack.c.0.s8 %v1910
        %v1912 = vlaneseq
        %v1913 = vshrl.u32 %v1912, 7
        %v1914 = vsub.s32 %v1911, %v1913
        %v1915 = vrot.slane %v1901, %v1914
        %v1916 = vcombine.low %v1787, %v1895
        %v1917 = vcombine.high %v1787, %v1895
        %v1919 = vunpack.c.l.s4 1983009808
        %v1920 = vunpack.c.0.s8 %v1919
        %v1921 = vlaneseq
        %v1922 = vshrl.u32 %v1921, 7
        %v1923 = vsub.s32 %v1920, %v1922
        %v1924 = vrot.slane %v1916, %v1923
        %v1926 = vunpack.c.l.s4 1983009808
        %v1927 = vunpack.c.0.s8 %v1926
        %v1928 = vlaneseq
        %v1929 = vshrl.u32 %v1928, 7
        %v1930 = vsub.s32 %v1927, %v1929
        %v1931 = vrot.slane %v1917, %v1930
        %v1932 = vcombine.low %v1908, %v1924
        %v1933 = vcombine.high %v1908, %v1924
        %v1935 = vunpack.c.l.s4 1934713408
        %v1936 = vunpack.c.0.s8 %v1935
        %v1937 = vlaneseq
        %v1938 = vshrl.u32 %v1937, 7
        %v1939 = vsub.s32 %v1936, %v1938
        %v1940 = vrot.slane %v1932, %v1939
        %v1942 = vunpack.c.l.s4 1934713408
        %v1943 = vunpack.c.0.s8 %v1942
        %v1944 = vlaneseq
        %v1945 = vshrl.u32 %v1944, 7
        %v1946 = vsub.s32 %v1943, %v1945
        %v1947 = vrot.slane %v1933, %v1946
        %v1948 = vcombine.low %v1915, %v1931
        %v1949 = vcombine.high %v1915, %v1931
        %v1951 = vunpack.c.l.s4 1934713408
        %v1952 = vunpack.c.0.s8 %v1951
        %v1953 = vlaneseq
        %v1954 = vshrl.u32 %v1953, 7
        %v1955 = vsub.s32 %v1952, %v1954
        %v1956 = vrot.slane %v1948, %v1955
        %v1958 = vunpack.c.l.s4 1934713408
        %v1959 = vunpack.c.0.s8 %v1958
        %v1960 = vlaneseq
        %v1961 = vshrl.u32 %v1960, 7
        %v1962 = vsub.s32 %v1959, %v1961
        %v1963 = vrot.slane %v1949, %v1962
        %v1964 = vcombine.high %v1940, 0.0
        %v1965 = vcombine.high %v1947, 0.0
        %v1966 = vcombine.high %v1956, 0.0
        %v1967 = vcombine.high %v1963, 0.0
        %v1968 = vcombine.low %v1940, %v1947
        %v1970 = vunpack.c.l.s4 1983009808
        %v1971 = vunpack.c.0.s8 %v1970
        %v1972 = vlaneseq
        %v1973 = vshrl.u32 %v1972, 7
        %v1974 = vsub.s32 %v1971, %v1973
        %v1975 = vrot.slane %v1968, %v1974
        %v1976 = vcombine.low %v1964, %v1965
        %v1978 = vunpack.c.l.s4 1983009808
        %v1979 = vunpack.c.0.s8 %v1978
        %v1980 = vlaneseq
        %v1981 = vshrl.u32 %v1980, 7
        %v1982 = vsub.s32 %v1979, %v1981
        %v1983 = vrot.slane %v1976, %v1982
        %v1984 = vcombine.low %v1956, %v1963
        %v1986 = vunpack.c.l.s4 1983009808
        %v1987 = vunpack.c.0.s8 %v1986
        %v1988 = vlaneseq
        %v1989 = vshrl.u32 %v1988, 7
        %v1990 = vsub.s32 %v1987, %v1989
        %v1991 = vrot.slane %v1984, %v1990
        %v1992 = vcombine.low %v1966, %v1967
        %v1994 = vunpack.c.l.s4 1983009808
        %v1995 = vunpack.c.0.s8 %v1994
        %v1996 = vlaneseq
        %v1997 = vshrl.u32 %v1996, 7
        %v1998 = vsub.s32 %v1995, %v1997
        %v1999 = vrot.slane %v1992, %v1998
        %v2000 = vcombine.low %v1975, %v1983
        %v2001 = vcombine.high %v1975, %v1983
        %v2003 = vunpack.c.l.s4 1934713408
        %v2004 = vunpack.c.0.s8 %v2003
        %v2005 = vlaneseq
        %v2006 = vshrl.u32 %v2005, 7
        %v2007 = vsub.s32 %v2004, %v2006
        %v2008 = vrot.slane %v2000, %v2007
        %v2010 = vunpack.c.l.s4 1934713408
        %v2011 = vunpack.c.0.s8 %v2010
        %v2012 = vlaneseq
        %v2013 = vshrl.u32 %v2012, 7
        %v2014 = vsub.s32 %v2011, %v2013
        %v2015 = vrot.slane %v2001, %v2014
        %v2016 = vcombine.low %v1991, %v1999
        %v2017 = vcombine.high %v1991, %v1999
        %v2019 = vunpack.c.l.s4 1934713408
        %v2020 = vunpack.c.0.s8 %v2019
        %v2021 = vlaneseq
        %v2022 = vshrl.u32 %v2021, 7
        %v2023 = vsub.s32 %v2020, %v2022
        %v2024 = vrot.slane %v2016, %v2023
        %v2026 = vunpack.c.l.s4 1934713408
        %v2027 = vunpack.c.0.s8 %v2026
        %v2028 = vlaneseq
        %v2029 = vshrl.u32 %v2028, 7
        %v2030 = vsub.s32 %v2027, %v2029
        %v2031 = vrot.slane %v2017, %v2030
        %v2032 = vcombine.low %v2008, %v2024
        %v2033 = vcombine.high %v2008, %v2024
        %v2034 = vcombine.low %v2015, %v2031
        %v2035 = vcombine.high %v2015, %v2031
        %2037 = vrot.lane.b32.xlu0 %v2033, 8
        %v2038 = vpop.permute.xlu0 %2037
        %2041 = vrot.lane.b32.xlu0 %v2034, 16
        %v2042 = vpop.permute.xlu0 %2041
        %2045 = vrot.lane.b32.xlu0 %v2035, 24
        %v2046 = vpop.permute.xlu0 %2045
        %v2048 = vsel %vm1382, %v2032, %v2038
        %vm2049 = vcmask 130048
        %v2050 = vsel %vm2049, %v2048, %v2042
        %vm2051 = vcmask 195584
        %v2052 = vsel %vm2051, %v2050, %v2046
        %v2053 = vpack.c.bf16 %v2052, %v2052
        %v2054 = vld [vmem:[%s5] sm:$0xf]
        %v2055 = vld [vmem:[%s5 + $0x4] sm:$0xf]
        %v2056 = vld [vmem:[%s5 + $0x8] sm:$0xf]
        %v2057 = vld [vmem:[%s5 + $0xc] sm:$0xf]
        %v2058 = vld [vmem:[%s6] sm:$0x1]
        %v2060 = vlaneseq
        %v2061 = vshrl.u32 %v2060, 7
        %v2062 = vsub.s32 0, %v2061
        %v2063 = vrot.slane %v2058, %v2062
        %v2069 = vunpack.c.l.b16 %v2054
        %v2070 = vunpack.c.l.b16 %v2055
        %v2071 = vunpack.c.l.b16 %v2056
        %v2072 = vunpack.c.l.b16 %v2057
        %v2073 = vpack.c.b16 %v2070, %v2069
        %v2074 = vpack.c.b16 %v2072, %v2071
        %v2078 = vsel %vm764, %v2053, 0
        %2080 = vmatprep.subr.bf16.mxu0 0
        %2081 = vmatpush1.bf16.msra.mxu0 %v2073
        %2082 = vmatprep.subr.bf16.mxu0 0
        %2083 = vmatpush1.bf16.msra.mxu0 %v2074
        %2084 = vmatprep.subr.bf16.mxu0 0
        %2085 = vmatpush1.bf16.msra.mxu0 0
        %2086 = vmatprep.subr.bf16.mxu0 0
        %2087 = vmatpush1.bf16.msra.mxu0 0
        %2088 = vmatprep.subr.bf16.mxu0 0
        %2089 = vmatpush1.bf16.msra.mxu0 0
        %2090 = vmatprep.subr.bf16.mxu0 0
        %2091 = vmatpush1.bf16.msra.mxu0 0
        %2092 = vmatprep.subr.bf16.mxu0 0
        %2093 = vmatpush1.bf16.msra.mxu0 0
        %2094 = vmatprep.subr.bf16.mxu0 0
        %2095 = vmatpush1.bf16.msra.mxu0 0
        %2096 = vmatprep.subr.bf16.mxu0 0
        %2097 = vmatpush1.bf16.msra.mxu0 0
        %2098 = vmatprep.subr.bf16.mxu0 0
        %2099 = vmatpush1.bf16.msra.mxu0 0
        %2100 = vmatprep.subr.bf16.mxu0 0
        %2101 = vmatpush1.bf16.msra.mxu0 0
        %2102 = vmatprep.subr.bf16.mxu0 0
        %2103 = vmatpush1.bf16.msra.mxu0 0
        %2104 = vmatprep.subr.bf16.mxu0 0
        %2105 = vmatpush1.bf16.msra.mxu0 0
        %2106 = vmatprep.subr.bf16.mxu0 0
        %2107 = vmatpush1.bf16.msra.mxu0 0
        %2108 = vmatprep.subr.bf16.mxu0 0
        %2109 = vmatpush1.bf16.msra.mxu0 0
        %2110 = vmatprep.subr.bf16.mxu0 0
        %2111 = vmatpush1.bf16.msra.mxu0 0
        %2112 = vmatprep.mubr.bf16.mxu0 0
        %2113 = vmatmul.mubr.bf16.gmra.mrb[0].mxu0 %v2078
        %v2114 = vpop.f32.mrb[0].mxu0
        %v2115 = vadd.f32 %v2063, %v2114
        %v2116 = vpop.f32.mrb[0].mxu0
        %v2117 = vpop.f32.mrb[0].mxu0
        %v2118 = vpop.f32.mrb[0].mxu0
        %2119 = vdwg.mxu0
        %v2120 = vadd.f32 %v742, %v2115
        %v2121 = vld [vmem:[%s7] sm:$0x1]
        %v2122 = vld [vmem:[%s8] sm:$0x1]
        %v2123 = vsel %vm764, %v2120, 0.0
        %2124 = vadd.xlane.f32.xlu0 %v2123
        %v2125 = vpop.xlane.xlu0 %2124
        %v2126 = vrcp.pop 32.0
        %v2127 = vmul.f32 %v2125, %v2126
        %v2128 = vsub.f32 %v2120, %v2127
        %v2129 = vmul.f32 %v2128, %v2128
        %v2130 = vsel %vm764, %v2129, 0.0
        %2131 = vadd.xlane.f32.xlu0 %v2130
        %v2132 = vpop.xlane.xlu0 %2131
        %v2133 = vmul.f32 %v2132, %v2126
        %v2134 = vadd.f32 %v2133, 1e-05
        %v2135 = vrsqrt.pop %v2134
        %v2136 = vmul.f32 %v2128, %v2135
        %v2138 = vlaneseq
        %v2139 = vshrl.u32 %v2138, 7
        %v2140 = vsub.s32 0, %v2139
        %v2141 = vrot.slane %v2121, %v2140
        %v2143 = vmul.f32 %v2136, %v2141
        %v2145 = vlaneseq
        %v2146 = vshrl.u32 %v2145, 7
        %v2147 = vsub.s32 0, %v2146
        %v2148 = vrot.slane %v2122, %v2147
        %v2150 = vadd.f32 %v2143, %v2148
        %v2151 = vpack.c.bf16 %v2150, %v2150
        %v2152 = vld [vmem:[%s9] sm:$0xf]
        %v2153 = vld [vmem:[%s9 + $0x4] sm:$0xf]
        %v2154 = vld [vmem:[%s9 + $0x8] sm:$0xf]
        %v2155 = vld [vmem:[%s9 + $0xc] sm:$0xf]
        %v2156 = vld [vmem:[%s10] sm:$0x1]
        %v2158 = vlaneseq
        %v2159 = vshrl.u32 %v2158, 7
        %v2160 = vsub.s32 0, %v2159
        %v2161 = vrot.slane %v2156, %v2160
        %v2167 = vunpack.c.l.b16 %v2152
        %v2168 = vunpack.c.l.b16 %v2153
        %v2169 = vunpack.c.l.b16 %v2154
        %v2170 = vunpack.c.l.b16 %v2155
        %v2171 = vpack.c.b16 %v2168, %v2167
        %v2172 = vpack.c.b16 %v2170, %v2169
        %v2176 = vsel %vm764, %v2151, 0
        %2178 = vmatprep.subr.bf16.mxu0 0
        %2179 = vmatpush1.bf16.msra.mxu0 %v2171
        %2180 = vmatprep.subr.bf16.mxu0 0
        %2181 = vmatpush1.bf16.msra.mxu0 %v2172
        %2182 = vmatprep.subr.bf16.mxu0 0
        %2183 = vmatpush1.bf16.msra.mxu0 0
        %2184 = vmatprep.subr.bf16.mxu0 0
        %2185 = vmatpush1.bf16.msra.mxu0 0
        %2186 = vmatprep.subr.bf16.mxu0 0
        %2187 = vmatpush1.bf16.msra.mxu0 0
        %2188 = vmatprep.subr.bf16.mxu0 0
        %2189 = vmatpush1.bf16.msra.mxu0 0
        %2190 = vmatprep.subr.bf16.mxu0 0
        %2191 = vmatpush1.bf16.msra.mxu0 0
        %2192 = vmatprep.subr.bf16.mxu0 0
        %2193 = vmatpush1.bf16.msra.mxu0 0
        %2194 = vmatprep.subr.bf16.mxu0 0
        %2195 = vmatpush1.bf16.msra.mxu0 0
        %2196 = vmatprep.subr.bf16.mxu0 0
        %2197 = vmatpush1.bf16.msra.mxu0 0
        %2198 = vmatprep.subr.bf16.mxu0 0
        %2199 = vmatpush1.bf16.msra.mxu0 0
        %2200 = vmatprep.subr.bf16.mxu0 0
        %2201 = vmatpush1.bf16.msra.mxu0 0
        %2202 = vmatprep.subr.bf16.mxu0 0
        %2203 = vmatpush1.bf16.msra.mxu0 0
        %2204 = vmatprep.subr.bf16.mxu0 0
        %2205 = vmatpush1.bf16.msra.mxu0 0
        %2206 = vmatprep.subr.bf16.mxu0 0
        %2207 = vmatpush1.bf16.msra.mxu0 0
        %2208 = vmatprep.subr.bf16.mxu0 0
        %2209 = vmatpush1.bf16.msra.mxu0 0
        %2210 = vmatprep.mubr.bf16.mxu0 0
        %2211 = vmatmul.mubr.bf16.gmra.mrb[0].mxu0 %v2176
        %v2212 = vpop.f32.mrb[0].mxu0
        %v2213 = vadd.f32 %v2161, %v2212
        %v2214 = vpop.f32.mrb[0].mxu0
        %v2215 = vpop.f32.mrb[0].mxu0
        %v2216 = vpop.f32.mrb[0].mxu0
        %2217 = vdwg.mxu0
        %v2218 = vmul.f32 %v2213, %v2213
        %v2219 = vmul.f32 %v2213, %v2218
        %v2220 = vmul.f32 %v2219, 0.044715
        %v2221 = vadd.f32 %v2213, %v2220
        %v2222 = vmul.f32 %v2221, 0.7978846
        %v2223 = vtanh.pop %v2222
        %v2224 = vadd.f32 %v2223, 1.0
        %v2225 = vmul.f32 %v2224, 0.5
        %v2226 = vmul.f32 %v2213, %v2225
        %v2227 = vpack.c.bf16 %v2226, %v2226
        %v2228 = vld [vmem:[%s11] sm:$0xf]
        %v2229 = vld [vmem:[%s11 + $0x4] sm:$0xf]
        %v2230 = vld [vmem:[%s11 + $0x8] sm:$0xf]
        %v2231 = vld [vmem:[%s11 + $0xc] sm:$0xf]
        %v2232 = vld [vmem:[%s11 + $0x10] sm:$0xf]
        %v2233 = vld [vmem:[%s11 + $0x14] sm:$0xf]
        %v2234 = vld [vmem:[%s11 + $0x18] sm:$0xf]
        %v2235 = vld [vmem:[%s11 + $0x1c] sm:$0xf]
        %v2236 = vld [vmem:[%s11 + $0x20] sm:$0xf]
        %v2237 = vld [vmem:[%s11 + $0x24] sm:$0xf]
        %v2238 = vld [vmem:[%s11 + $0x28] sm:$0xf]
        %v2239 = vld [vmem:[%s11 + $0x2c] sm:$0xf]
        %v2240 = vld [vmem:[%s11 + $0x30] sm:$0xf]
        %v2241 = vld [vmem:[%s11 + $0x34] sm:$0xf]
        %v2242 = vld [vmem:[%s11 + $0x38] sm:$0xf]
        %v2243 = vld [vmem:[%s11 + $0x3c] sm:$0xf]
        %v2244 = vld [vmem:[%s12] sm:$0x1]
        %v2246 = vlaneseq
        %v2247 = vshrl.u32 %v2246, 7
        %v2248 = vsub.s32 0, %v2247
        %v2249 = vrot.slane %v2244, %v2248
        %v2267 = vunpack.c.l.b16 %v2228
        %v2268 = vunpack.c.l.b16 %v2229
        %v2269 = vunpack.c.l.b16 %v2230
        %v2270 = vunpack.c.l.b16 %v2231
        %v2271 = vunpack.c.l.b16 %v2232
        %v2272 = vunpack.c.l.b16 %v2233
        %v2273 = vunpack.c.l.b16 %v2234
        %v2274 = vunpack.c.l.b16 %v2235
        %v2275 = vunpack.c.l.b16 %v2236
        %v2276 = vunpack.c.l.b16 %v2237
        %v2277 = vunpack.c.l.b16 %v2238
        %v2278 = vunpack.c.l.b16 %v2239
        %v2279 = vunpack.c.l.b16 %v2240
        %v2280 = vunpack.c.l.b16 %v2241
        %v2281 = vunpack.c.l.b16 %v2242
        %v2282 = vunpack.c.l.b16 %v2243
        %v2283 = vpack.c.b16 %v2268, %v2267
        %v2284 = vpack.c.b16 %v2270, %v2269
        %v2285 = vpack.c.b16 %v2272, %v2271
        %v2286 = vpack.c.b16 %v2274, %v2273
        %v2287 = vpack.c.b16 %v2276, %v2275
        %v2288 = vpack.c.b16 %v2278, %v2277
        %v2289 = vpack.c.b16 %v2280, %v2279
        %v2290 = vpack.c.b16 %v2282, %v2281
        %2299 = vmatprep.subr.bf16.mxu0 0
        %2300 = vmatpush1.bf16.msra.mxu0 %v2283
        %2301 = vmatprep.subr.bf16.mxu0 0
        %2302 = vmatpush1.bf16.msra.mxu0 %v2284
        %2303 = vmatprep.subr.bf16.mxu0 0
        %2304 = vmatpush1.bf16.msra.mxu0 %v2285
        %2305 = vmatprep.subr.bf16.mxu0 0
        %2306 = vmatpush1.bf16.msra.mxu0 %v2286
        %2307 = vmatprep.subr.bf16.mxu0 0
        %2308 = vmatpush1.bf16.msra.mxu0 %v2287
        %2309 = vmatprep.subr.bf16.mxu0 0
        %2310 = vmatpush1.bf16.msra.mxu0 %v2288
        %2311 = vmatprep.subr.bf16.mxu0 0
        %2312 = vmatpush1.bf16.msra.mxu0 %v2289
        %2313 = vmatprep.subr.bf16.mxu0 0
        %2314 = vmatpush1.bf16.msra.mxu0 %v2290
        %2315 = vmatprep.subr.bf16.mxu0 0
        %2316 = vmatpush1.bf16.msra.mxu0 0
        %2317 = vmatprep.subr.bf16.mxu0 0
        %2318 = vmatpush1.bf16.msra.mxu0 0
        %2319 = vmatprep.subr.bf16.mxu0 0
        %2320 = vmatpush1.bf16.msra.mxu0 0
        %2321 = vmatprep.subr.bf16.mxu0 0
        %2322 = vmatpush1.bf16.msra.mxu0 0
        %2323 = vmatprep.subr.bf16.mxu0 0
        %2324 = vmatpush1.bf16.msra.mxu0 0
        %2325 = vmatprep.subr.bf16.mxu0 0
        %2326 = vmatpush1.bf16.msra.mxu0 0
        %2327 = vmatprep.subr.bf16.mxu0 0
        %2328 = vmatpush1.bf16.msra.mxu0 0
        %2329 = vmatprep.subr.bf16.mxu0 0
        %2330 = vmatpush1.bf16.msra.mxu0 0
        %2331 = vmatprep.mubr.bf16.mxu0 0
        %2332 = vmatmul.mubr.bf16.gmra.mrb[0].mxu0 %v2227
        %v2333 = vpop.f32.mrb[0].mxu0
        %v2334 = vadd.f32 %v2249, %v2333
        %v2335 = vpop.f32.mrb[0].mxu0
        %v2336 = vpop.f32.mrb[0].mxu0
        %v2337 = vpop.f32.mrb[0].mxu0
        %2338 = vdwg.mxu0
        %v2339 = vadd.f32 %v2120, %v2334
        %2340 = vst.msk [vmem:[%s445] sm:$0xff] %vm764, %v2339
        %s2341 = sand.u32 %s327, 1
        %s2342 = scalar_lea.sflag [#allocation6], %s2341
        %s2343 = sand.u32 %s327, 1
        %s2344 = smul.addr %s2343, 8
        %s2345 = scalar_lea.vmem [#allocation5], %s2344
        // Predicated region
        $region77: #{tpu_custom_call.1} parent=71 // pred_check
          %p2346 = pneg %p337
        $region78: #{tpu_custom_call.1} parent=71 // pred_check_branch
          %2348 = sbr.rel (%p2346) target = $region80
        $region79: #{tpu_custom_call.1} parent=71 // pred_region
          %s2350 = ssub.s32 128, 128
          %2351 = vsyncadd %s2342, %s2350
          %s2352 = sadd.s32 %s32, %s31
          %s2353 = smul.addr %s2352, 128
          %s2354 = scalar_lea.hbm %s13, %s2353
          %s2356 = sshll.u32 %s2345, 4
          %s2357 = int_to_ptr.vmem [resolvable:$true] %s2356
          %2359 = dma.vmem_to_hbm [thread:$0]  %s2357, 128, %s2354, %s2342
        $region80: #{tpu_custom_call.1} parent=71 // pred_fallthru
          _
      $region72: #{tpu_custom_call.1} parent=5 // pred_fallthru
        _
      %p2360 = scmp.le.s32.totalorder 2, %s22
      // Predicated region
      $region81: #{tpu_custom_call.1} parent=5 // pred_check
        %p2361 = pneg %p2360
      $region82: #{tpu_custom_call.1} parent=5 // pred_check_branch
        %2363 = sbr.rel (%p2361) target = $region84
      $region83: #{tpu_custom_call.1} parent=5 // pred_region
        %s2364 = ssub.s32 %s22, 2
        // Predicated region
        $region85: #{tpu_custom_call.1} parent=83 // pred_check
          %p2365 = pneg %p343
        $region86: #{tpu_custom_call.1} parent=83 // pred_check_branch
          %2367 = sbr.rel (%p2365) target = $region88
        $region87: #{tpu_custom_call.1} parent=83 // pred_region
          %s2368 = sand.u32 %s328, 1
          %s2369 = scalar_lea.sflag [#allocation6], %s2368
          %s2370 = sand.u32 %s328, 1
          %s2371 = smul.addr %s2370, 8
          %s2372 = scalar_lea.vmem [#allocation5], %s2371
          %2373 = dma.done %s2369, 128
        $region88: #{tpu_custom_call.1} parent=83 // pred_fallthru
          _
      $region84: #{tpu_custom_call.1} parent=5 // pred_fallthru
        _
    $region6: #{tpu_custom_call.1} parent=1 // loop_footer
      %s26 = sadd.s32 1, %s22
    $region7: #{tpu_custom_call.1} parent=1 // loop_footer_branch
      %21 = sbr.rel target = $region3
    $region8: #{tpu_custom_call.1} parent=1 // loop_exit
      _
    %2374 = vsyncpa [#allocation6], 1
    %s2375 = scalar_lea.sflag [#allocation6], 1
    %2376 = vsyncpa %s2375, 1

</llo_original>
